<compile_context>
chip_gen: v5e
topology: v5e:2x2
jax: 0.10.0
libtpu: 0.0.40
codegen_flags: <defaults>
</compile_context>

<pallas_src>
import jax
import jax.numpy as jnp
from jax.experimental import pallas as pl
from jax.experimental.pallas import tpu as pltpu


def _round_up(x, m):
    return ((x + m - 1) // m) * m


def _sublane(itemsize):
    return {4: 8, 2: 16, 1: 32}.get(itemsize, 8)


def _vmem_estimate(tm, n_e, e_dim, z_dtype, e_dtype, const_bufs=1):
    """Padded-shape VMEM estimate (lane dim -> 128, sublane dim -> dtype tile)."""
    z_it = jnp.dtype(z_dtype).itemsize
    e_it = jnp.dtype(e_dtype).itemsize
    lane = 128
    tm_p = _round_up(tm, lane)
    # double-buffered per-tile streams
    z_in = 2 * _round_up(e_dim, _sublane(z_it)) * tm_p * z_it
    zq_out = 2 * _round_up(e_dim, _sublane(z_it)) * tm_p * z_it
    idx_out = 2 * 8 * tm_p * 4
    sq_out = 2 * 8 * tm_p * 4
    # grid-constant inputs (single- or double-buffered)
    codebook = const_bufs * _round_up(n_e, _sublane(e_it)) * _round_up(e_dim, lane) * e_it
    e_sq = const_bufs * _round_up(n_e, 8) * lane * 4
    # ~6 live f32 (n_e, tm) planes (ez, d, cmp, select, iota, onehot) plus
    # ~2 live f32 (e_dim, tm) planes (z_q, diff)
    interm = (6 * _round_up(n_e, 8) * tm_p + 2 * _round_up(e_dim, 8) * tm_p) * 4
    return z_in + zq_out + idx_out + sq_out + codebook + e_sq + interm


_TM_CANDIDATES = (4096, 2048, 1024, 512, 256, 128)


def _pick_tm(hw, n_e, e_dim, z_dtype, e_dtype, budget_bytes, const_bufs=1):
    cap_tm = max(128, _round_up(hw, 128))
    for t in _TM_CANDIDATES:
        if t > cap_tm:
            continue
        if _vmem_estimate(t, n_e, e_dim, z_dtype, e_dtype, const_bufs) <= budget_bytes:
            return t
    # TODO(synk): codebook-chunk grid axis for huge n_e; never degrade below a
    # 128-wide (MXU-efficient, lane-dense) tile.
    return 128


def _vmem_caps():
    """(tile-picking budget, vmem_limit_bytes cap), generation-aware."""
    cap = 64 * 1024 * 1024
    try:
        info = pltpu.get_tpu_info()
        cap = int(getattr(info, "vmem_capacity_bytes", cap)) or cap
    except Exception:
        pass
    if cap >= 100 * 1024 * 1024:      # v5e / v6e: 128 MiB of VMEM
        return 88 * 1024 * 1024, 104 * 1024 * 1024
    return 40 * 1024 * 1024, 56 * 1024 * 1024   # v7x: 64 MiB of VMEM


def _make_vq_kernel(distance_in_bf16):
    def _vq_kernel(z_ref, e_ref, esqh_ref, zq_ref, idx_ref, sq_ref):
        z = z_ref[0]                           # (e_dim, tm), native dtype
        e = e_ref[...]                         # (n_e, e_dim), native dtype
        n_e = e_ref.shape[0]

        if distance_in_bf16:
            # Optional: bf16 distance matmul for large e_dim (MXU-bound regime).
            z_d = z.astype(jnp.bfloat16)
            e_d = e.astype(jnp.bfloat16)
        else:
            z_d, e_d = z, e

        # e @ z_tile on the MXU with f32 accumulation; transposed so spatial
        # columns live on the lane axis.
        ez = jax.lax.dot_general(
            e_d, z_d, dimension_numbers=(((1,), (0,)), ((), ())),
            preferred_element_type=jnp.float32)          # (n_e, tm)
        # ||z||^2 dropped (constant per column); factor 2 folded into 0.5||e||^2.
        d = esqh_ref[...] - ez                           # (n_e, tm)

        # First-occurrence argmin along the codebook (sublane) axis.
        min_d = jnp.min(d, axis=0, keepdims=True)        # (1, tm)
        iota = jax.lax.broadcasted_iota(jnp.int32, d.shape, 0)
        idx = jnp.min(jnp.where(d == min_d, iota, jnp.int32(n_e)),
                      axis=0, keepdims=True)             # (1, tm)

        # Gather codebook rows via one-hot matmul (exact: one nonzero per
        # column), produced transposed so the store is lane-dense.
        onehot = (iota == idx).astype(e.dtype)           # (n_e, tm)
        z_q = jax.lax.dot_general(
            e, onehot, dimension_numbers=(((0,), (0,)), ((), ())),
            preferred_element_type=jnp.float32)          # (e_dim, tm)

        zq_ref[0] = z_q.astype(zq_ref.dtype)
        idx_ref[...] = jnp.reshape(idx, idx_ref.shape)   # (1, 1, tm), lane-dense

        # Per-column sum over e_dim of (z_q - z)^2; wrapper sums valid columns.
        diff = z_q - z.astype(jnp.float32)
        sq_ref[...] = jnp.reshape(jnp.sum(diff * diff, axis=0, keepdims=True),
                                  sq_ref.shape)
    return _vq_kernel


def vector_quantize(z_nchw, embedding, beta=0.25, tm=None, distance_in_bf16=False):
    """Forward of VectorQuantizer (eval mode).

    Returns (z_q NCHW, loss, (None, None, min_encoding_indices)).
    """
    B, C, H, W = z_nchw.shape
    n_e, e_dim = embedding.shape
    assert C == e_dim, "channel dim must equal e_dim"
    hw = H * W

    # NCHW is already (B, e_dim, H*W) contiguously: no HBM transpose.
    z3 = z_nchw.reshape(B, e_dim, hw)

    budget, limit_cap = _vmem_caps()
    if tm is None:
        tm = _pick_tm(hw, n_e, e_dim, z3.dtype, embedding.dtype, budget, const_bufs=1)
    tm = max(128, _round_up(int(tm), 128))

    hw_pad = _round_up(hw, tm)
    if hw_pad != hw:
        z3 = jnp.pad(z3, ((0, 0), (0, 0), (0, hw_pad - hw)))
    num_tiles = hw_pad // tm

    est = _vmem_estimate(tm, n_e, e_dim, z3.dtype, embedding.dtype, const_bufs=1)
    vmem_limit = int(min(limit_cap, max(32 * 1024 * 1024, (est * 3) // 2)))

    # Hoisted codebook norm with the factor 2 folded in: d = 0.5||e||^2 - e.z
    e_sq_half = 0.5 * jnp.sum(embedding.astype(jnp.float32) ** 2, axis=1,
                              keepdims=True)             # (n_e, 1)

    out_shape = (
        jax.ShapeDtypeStruct((B, e_dim, hw_pad), z3.dtype),   # z_q (channel-major)
        jax.ShapeDtypeStruct((B, 1, hw_pad), jnp.int32),      # indices, lane-dense
        jax.ShapeDtypeStruct((B, 1, hw_pad), jnp.float32),    # per-column sq error
    )

    def _run(single_buffer_constants):
        if single_buffer_constants:
            e_spec = pl.BlockSpec((n_e, e_dim), lambda b, i: (0, 0),
                                  pipeline_mode=pl.Buffered(1))
            esq_spec = pl.BlockSpec((n_e, 1), lambda b, i: (0, 0),
                                    pipeline_mode=pl.Buffered(1))
        else:
            e_spec = pl.BlockSpec((n_e, e_dim), lambda b, i: (0, 0))
            esq_spec = pl.BlockSpec((n_e, 1), lambda b, i: (0, 0))
        return pl.pallas_call(
            _make_vq_kernel(distance_in_bf16),
            out_shape=out_shape,
            grid_spec=pltpu.PrefetchScalarGridSpec(
                num_scalar_prefetch=0,
                grid=(B, num_tiles),
                in_specs=[
                    pl.BlockSpec((1, e_dim, tm), lambda b, i: (b, 0, i)),  # z cols
                    e_spec,                                                # codebook
                    esq_spec,                                              # 0.5||e||^2
                ],
                out_specs=(
                    pl.BlockSpec((1, e_dim, tm), lambda b, i: (b, 0, i)),  # z_q
                    pl.BlockSpec((1, 1, tm), lambda b, i: (b, 0, i)),      # indices
                    pl.BlockSpec((1, 1, tm), lambda b, i: (b, 0, i)),      # sq sums
                ),
            ),
            compiler_params=pltpu.CompilerParams(
                dimension_semantics=("parallel", "parallel"),
                vmem_limit_bytes=vmem_limit),
        )(z3, embedding, e_sq_half)

    try:
        zq3, idx3, sq3 = _run(True)
    except Exception:
        # TODO(synk): some jax versions reject pl.Buffered(1) single-buffering
        # of grid-constant inputs; fall back to default double-buffering.
        zq3, idx3, sq3 = _run(False)

    # beta * mse_loss(z_q.detach(), z): mean over all B*C*H*W elements
    # (padded tail columns are sliced off before the reduction).
    loss = beta * jnp.sum(sq3[:, 0, :hw]) / jnp.float32(B * hw * e_dim)
    # Straight-through z + (z_q - z).detach() equals z_q in value (forward only).
    z_q = zq3[:, :, :hw].reshape(B, C, H, W)
    min_encoding_indices = idx3[:, 0, :hw].reshape(B * hw)
    return z_q, loss, (None, None, min_encoding_indices)


if __name__ == "__main__":
    key = jax.random.PRNGKey(0)
    k_z, k_e = jax.random.split(key)

    # small shapes consistent with the module: NCHW input, C == e_dim
    B, C, H, W = 2, 8, 16, 16
    n_e, e_dim, beta = 32, C, 0.25

    z = jax.random.normal(k_z, (B, C, H, W), dtype=jnp.float32)
    # nn.Embedding weight init: uniform(-1/n_e, 1/n_e)
    embedding = jax.random.uniform(k_e, (n_e, e_dim), dtype=jnp.float32,
                                   minval=-1.0 / n_e, maxval=1.0 / n_e)

    z_q, loss, (_, _, indices) = vector_quantize(z, embedding, beta=beta)
    jax.block_until_ready((z_q, loss, indices))

    # pure-JAX reference check of the forward semantics
    zf = jnp.transpose(z, (0, 2, 3, 1)).reshape(-1, e_dim)
    d_ref = (jnp.sum(zf ** 2, axis=1, keepdims=True)
             + jnp.sum(embedding ** 2, axis=1)
             - 2.0 * zf @ embedding.T)
    ref_idx = jnp.argmin(d_ref, axis=1).astype(jnp.int32)
    ref_zq = jnp.transpose(embedding[ref_idx].reshape(B, H, W, e_dim), (0, 3, 1, 2))
    ref_loss = beta * jnp.mean((ref_zq - z) ** 2)

    assert indices.shape == (B * H * W,)
    assert jnp.array_equal(indices, ref_idx), "indices mismatch"
    assert jnp.allclose(z_q, ref_zq, atol=1e-6), "z_q mismatch"
    assert jnp.allclose(loss, ref_loss, rtol=1e-4, atol=1e-7), "loss mismatch"

    print("KERNEL_OK")
</pallas_src>

<mosaic_0001>
module attributes {stable_mosaic.version = 11 : i64} {
  func.func @_vq_kernel(%arg0: i32, %arg1: i32, %arg2: memref<1x8x256xf32, #tpu.memory_space<vmem>>, %arg3: memref<32x8xf32, #tpu.memory_space<vmem>>, %arg4: memref<32x1xf32, #tpu.memory_space<vmem>>, %arg5: memref<1x8x256xf32, #tpu.memory_space<vmem>>, %arg6: memref<1x1x256xi32, #tpu.memory_space<vmem>>, %arg7: memref<1x1x256xf32, #tpu.memory_space<vmem>>) attributes {dimension_semantics = [#tpu.dimension_semantics<parallel>, #tpu.dimension_semantics<parallel>], iteration_bounds = array<i64: 2, 1>, scalar_prefetch = 0 : i64, scratch_operands = 0 : i64, tpu.core_type = #tpu.core_type<tc>, window_params = [{transform_indices = @transform_0, window_bounds = array<i64: 1, 8, 256>}, {pipeline_mode = #tpu.pipeline_mode<synchronous>, transform_indices = @transform_1, window_bounds = array<i64: 32, 8>}, {pipeline_mode = #tpu.pipeline_mode<synchronous>, transform_indices = @transform_2, window_bounds = array<i64: 32, 1>}, {transform_indices = @transform_3, window_bounds = array<i64: 1, 8, 256>}, {transform_indices = @transform_4, window_bounds = array<i64: 1, 1, 256>}, {transform_indices = @transform_5, window_bounds = array<i64: 1, 1, 256>}]} {
    %c0 = arith.constant 0 : index
    %c0_0 = arith.constant 0 : index
    %c0_1 = arith.constant 0 : index
    %0 = vector.load %arg2[%c0, %c0_0, %c0_1] : memref<1x8x256xf32, #tpu.memory_space<vmem>>, vector<1x8x256xf32>
    %1 = vector.shape_cast %0 : vector<1x8x256xf32> to vector<8x256xf32>
    %c0_2 = arith.constant 0 : index
    %c0_3 = arith.constant 0 : index
    %2 = vector.load %arg3[%c0_2, %c0_3] : memref<32x8xf32, #tpu.memory_space<vmem>>, vector<32x8xf32>
    %cst = arith.constant dense<0.000000e+00> : vector<32x256xf32>
    %3 = tpu.matmul %2, %1, %cst {dimension_numbers = #tpu.dot_dimension_numbers<[1], [0], [0], [1], [0, 0, 1, 1], [], []>} : vector<32x8xf32>, vector<8x256xf32>, vector<32x256xf32> -> vector<32x256xf32>
    %c0_4 = arith.constant 0 : index
    %c0_5 = arith.constant 0 : index
    %4 = vector.load %arg4[%c0_4, %c0_5] : memref<32x1xf32, #tpu.memory_space<vmem>>, vector<32x1xf32>
    %5 = vector.broadcast %4 : vector<32x1xf32> to vector<32x256xf32>
    %6 = arith.subf %5, %3 : vector<32x256xf32>
    %cst_6 = arith.constant dense<0x7F800000> : vector<256xf32>
    %7 = vector.multi_reduction <minimumf>, %6, %cst_6 [0] : vector<32x256xf32> to vector<256xf32>
    %8 = vector.shape_cast %7 : vector<256xf32> to vector<1x256xf32>
    %9 = tpu.iota {dimensions = array<i32: 0>} : vector<32x256xi32>
    %10 = vector.broadcast %8 : vector<1x256xf32> to vector<32x256xf32>
    %11 = arith.cmpf oeq, %6, %10 : vector<32x256xf32>
    %c32_i32 = arith.constant 32 : i32
    %12 = vector.broadcast %c32_i32 : i32 to vector<32x256xi32>
    %13 = arith.select %11, %9, %12 : vector<32x256xi1>, vector<32x256xi32>
    %cst_7 = arith.constant dense<2147483647> : vector<256xi32>
    %14 = vector.multi_reduction <minsi>, %13, %cst_7 [0] : vector<32x256xi32> to vector<256xi32>
    %15 = vector.shape_cast %14 : vector<256xi32> to vector<1x256xi32>
    %16 = vector.broadcast %15 : vector<1x256xi32> to vector<32x256xi32>
    %17 = arith.cmpi eq, %9, %16 : vector<32x256xi32>
    %18 = arith.extui %17 : vector<32x256xi1> to vector<32x256xi32>
    %19 = arith.sitofp %18 : vector<32x256xi32> to vector<32x256xf32>
    %cst_8 = arith.constant dense<0.000000e+00> : vector<8x256xf32>
    %20 = tpu.matmul %2, %19, %cst_8 {dimension_numbers = #tpu.dot_dimension_numbers<[0], [0], [1], [1], [0, 1, 1, 1], [], []>} : vector<32x8xf32>, vector<32x256xf32>, vector<8x256xf32> -> vector<8x256xf32>
    %c0_9 = arith.constant 0 : index
    %c0_10 = arith.constant 0 : index
    %c0_11 = arith.constant 0 : index
    %21 = vector.load %arg5[%c0_9, %c0_10, %c0_11] : memref<1x8x256xf32, #tpu.memory_space<vmem>>, vector<1x8x256xf32>
    %22 = vector.shape_cast %21 : vector<1x8x256xf32> to vector<8x256xf32>
    %23 = vector.shape_cast %20 : vector<8x256xf32> to vector<1x8x256xf32>
    tpu.vector_store %arg5[%c0_9, %c0_10, %c0_11], %23 {strides = array<i32>} : memref<1x8x256xf32, #tpu.memory_space<vmem>>, vector<1x8x256xf32>,
    %24 = vector.shape_cast %15 : vector<1x256xi32> to vector<1x1x256xi32>
    %c0_12 = arith.constant 0 : index
    %c0_13 = arith.constant 0 : index
    %c0_14 = arith.constant 0 : index
    %25 = vector.load %arg6[%c0_12, %c0_13, %c0_14] : memref<1x1x256xi32, #tpu.memory_space<vmem>>, vector<1x1x256xi32>
    tpu.vector_store %arg6[%c0_12, %c0_13, %c0_14], %24 {strides = array<i32>} : memref<1x1x256xi32, #tpu.memory_space<vmem>>, vector<1x1x256xi32>,
    %26 = arith.subf %20, %1 : vector<8x256xf32>
    %27 = arith.mulf %26, %26 : vector<8x256xf32>
    %cst_15 = arith.constant dense<0.000000e+00> : vector<256xf32>
    %28 = vector.multi_reduction <add>, %27, %cst_15 [0] : vector<8x256xf32> to vector<256xf32>
    %29 = vector.shape_cast %28 : vector<256xf32> to vector<1x256xf32>
    %30 = vector.shape_cast %29 : vector<1x256xf32> to vector<1x1x256xf32>
    %c0_16 = arith.constant 0 : index
    %c0_17 = arith.constant 0 : index
    %c0_18 = arith.constant 0 : index
    %31 = vector.load %arg7[%c0_16, %c0_17, %c0_18] : memref<1x1x256xf32, #tpu.memory_space<vmem>>, vector<1x1x256xf32>
    tpu.vector_store %arg7[%c0_16, %c0_17, %c0_18], %30 {strides = array<i32>} : memref<1x1x256xf32, #tpu.memory_space<vmem>>, vector<1x1x256xf32>,
    return
  }
  func.func @transform_0(%arg0: i32, %arg1: i32) -> (i32, i32, i32) {
    %c0_i32 = arith.constant 0 : i32
    %c0_i32_0 = arith.constant 0 : i32
    return %arg0, %c0_i32, %arg1 : i32, i32, i32
  }
  func.func @transform_1(%arg0: i32, %arg1: i32) -> (i32, i32) {
    %c0_i32 = arith.constant 0 : i32
    %c0_i32_0 = arith.constant 0 : i32
    %c0_i32_1 = arith.constant 0 : i32
    return %c0_i32, %c0_i32_0 : i32, i32
  }
  func.func @transform_2(%arg0: i32, %arg1: i32) -> (i32, i32) {
    %c0_i32 = arith.constant 0 : i32
    %c0_i32_0 = arith.constant 0 : i32
    %c0_i32_1 = arith.constant 0 : i32
    return %c0_i32, %c0_i32_0 : i32, i32
  }
  func.func @transform_3(%arg0: i32, %arg1: i32) -> (i32, i32, i32) {
    %c0_i32 = arith.constant 0 : i32
    %c0_i32_0 = arith.constant 0 : i32
    return %arg0, %c0_i32, %arg1 : i32, i32, i32
  }
  func.func @transform_4(%arg0: i32, %arg1: i32) -> (i32, i32, i32) {
    %c0_i32 = arith.constant 0 : i32
    %c0_i32_0 = arith.constant 0 : i32
    return %arg0, %c0_i32, %arg1 : i32, i32, i32
  }
  func.func @transform_5(%arg0: i32, %arg1: i32) -> (i32, i32, i32) {
    %c0_i32 = arith.constant 0 : i32
    %c0_i32_0 = arith.constant 0 : i32
    return %arg0, %c0_i32, %arg1 : i32, i32, i32
  }
}

module attributes {stable_mosaic.version = 11 : i64} {
  func.func @_vq_kernel(%arg0: i32, %arg1: i32, %arg2: memref<1x8x256xf32, #tpu.memory_space<vmem>>, %arg3: memref<32x8xf32, #tpu.memory_space<vmem>>, %arg4: memref<32x1xf32, #tpu.memory_space<vmem>>, %arg5: memref<1x8x256xf32, #tpu.memory_space<vmem>>, %arg6: memref<1x1x256xi32, #tpu.memory_space<vmem>>, %arg7: memref<1x1x256xf32, #tpu.memory_space<vmem>>) attributes {dimension_semantics = [#tpu.dimension_semantics<parallel>, #tpu.dimension_semantics<parallel>], iteration_bounds = array<i64: 2, 1>, scalar_prefetch = 0 : i64, scratch_operands = 0 : i64, tpu.core_type = #tpu.core_type<tc>, window_params = [{transform_indices = @transform_0, window_bounds = array<i64: 1, 8, 256>}, {pipeline_mode = #tpu.pipeline_mode<synchronous>, transform_indices = @transform_1, window_bounds = array<i64: 32, 8>}, {pipeline_mode = #tpu.pipeline_mode<synchronous>, transform_indices = @transform_2, window_bounds = array<i64: 32, 1>}, {transform_indices = @transform_3, window_bounds = array<i64: 1, 8, 256>}, {transform_indices = @transform_4, window_bounds = array<i64: 1, 1, 256>}, {transform_indices = @transform_5, window_bounds = array<i64: 1, 1, 256>}]} {
    %c0 = arith.constant 0 : index
    %c0_0 = arith.constant 0 : index
    %c0_1 = arith.constant 0 : index
    %0 = vector.load %arg2[%c0, %c0_0, %c0_1] : memref<1x8x256xf32, #tpu.memory_space<vmem>>, vector<1x8x256xf32>
    %1 = vector.shape_cast %0 : vector<1x8x256xf32> to vector<8x256xf32>
    %c0_2 = arith.constant 0 : index
    %c0_3 = arith.constant 0 : index
    %2 = vector.load %arg3[%c0_2, %c0_3] : memref<32x8xf32, #tpu.memory_space<vmem>>, vector<32x8xf32>
    %cst = arith.constant dense<0.000000e+00> : vector<32x256xf32>
    %3 = tpu.matmul %2, %1, %cst {dimension_numbers = #tpu.dot_dimension_numbers<[1], [0], [0], [1], [0, 0, 1, 1], [], []>} : vector<32x8xf32>, vector<8x256xf32>, vector<32x256xf32> -> vector<32x256xf32>
    %c0_4 = arith.constant 0 : index
    %c0_5 = arith.constant 0 : index
    %4 = vector.load %arg4[%c0_4, %c0_5] : memref<32x1xf32, #tpu.memory_space<vmem>>, vector<32x1xf32>
    %5 = vector.broadcast %4 : vector<32x1xf32> to vector<32x256xf32>
    %6 = arith.subf %5, %3 : vector<32x256xf32>
    %cst_6 = arith.constant dense<0x7F800000> : vector<256xf32>
    %7 = vector.multi_reduction <minimumf>, %6, %cst_6 [0] : vector<32x256xf32> to vector<256xf32>
    %8 = vector.shape_cast %7 : vector<256xf32> to vector<1x256xf32>
    %9 = tpu.iota {dimensions = array<i32: 0>} : vector<32x256xi32>
    %10 = vector.broadcast %8 : vector<1x256xf32> to vector<32x256xf32>
    %11 = arith.cmpf oeq, %6, %10 : vector<32x256xf32>
    %c32_i32 = arith.constant 32 : i32
    %12 = vector.broadcast %c32_i32 : i32 to vector<32x256xi32>
    %13 = arith.select %11, %9, %12 : vector<32x256xi1>, vector<32x256xi32>
    %cst_7 = arith.constant dense<2147483647> : vector<256xi32>
    %14 = vector.multi_reduction <minsi>, %13, %cst_7 [0] : vector<32x256xi32> to vector<256xi32>
    %15 = vector.shape_cast %14 : vector<256xi32> to vector<1x256xi32>
    %16 = vector.broadcast %15 : vector<1x256xi32> to vector<32x256xi32>
    %17 = arith.cmpi eq, %9, %16 : vector<32x256xi32>
    %18 = arith.extui %17 : vector<32x256xi1> to vector<32x256xi32>
    %19 = arith.sitofp %18 : vector<32x256xi32> to vector<32x256xf32>
    %cst_8 = arith.constant dense<0.000000e+00> : vector<8x256xf32>
    %20 = tpu.matmul %2, %19, %cst_8 {dimension_numbers = #tpu.dot_dimension_numbers<[0], [0], [1], [1], [0, 1, 1, 1], [], []>} : vector<32x8xf32>, vector<32x256xf32>, vector<8x256xf32> -> vector<8x256xf32>
    %c0_9 = arith.constant 0 : index
    %c0_10 = arith.constant 0 : index
    %c0_11 = arith.constant 0 : index
    %21 = vector.load %arg5[%c0_9, %c0_10, %c0_11] : memref<1x8x256xf32, #tpu.memory_space<vmem>>, vector<1x8x256xf32>
    %22 = vector.shape_cast %21 : vector<1x8x256xf32> to vector<8x256xf32>
    %23 = vector.shape_cast %20 : vector<8x256xf32> to vector<1x8x256xf32>
    tpu.vector_store %arg5[%c0_9, %c0_10, %c0_11], %23 {strides = array<i32>} : memref<1x8x256xf32, #tpu.memory_space<vmem>>, vector<1x8x256xf32>,
    %24 = vector.shape_cast %15 : vector<1x256xi32> to vector<1x1x256xi32>
    %c0_12 = arith.constant 0 : index
    %c0_13 = arith.constant 0 : index
    %c0_14 = arith.constant 0 : index
    %25 = vector.load %arg6[%c0_12, %c0_13, %c0_14] : memref<1x1x256xi32, #tpu.memory_space<vmem>>, vector<1x1x256xi32>
    tpu.vector_store %arg6[%c0_12, %c0_13, %c0_14], %24 {strides = array<i32>} : memref<1x1x256xi32, #tpu.memory_space<vmem>>, vector<1x1x256xi32>,
    %26 = arith.subf %20, %1 : vector<8x256xf32>
    %27 = arith.mulf %26, %26 : vector<8x256xf32>
    %cst_15 = arith.constant dense<0.000000e+00> : vector<256xf32>
    %28 = vector.multi_reduction <add>, %27, %cst_15 [0] : vector<8x256xf32> to vector<256xf32>
    %29 = vector.shape_cast %28 : vector<256xf32> to vector<1x256xf32>
    %30 = vector.shape_cast %29 : vector<1x256xf32> to vector<1x1x256xf32>
    %c0_16 = arith.constant 0 : index
    %c0_17 = arith.constant 0 : index
    %c0_18 = arith.constant 0 : index
    %31 = vector.load %arg7[%c0_16, %c0_17, %c0_18] : memref<1x1x256xf32, #tpu.memory_space<vmem>>, vector<1x1x256xf32>
    tpu.vector_store %arg7[%c0_16, %c0_17, %c0_18], %30 {strides = array<i32>} : memref<1x1x256xf32, #tpu.memory_space<vmem>>, vector<1x1x256xf32>,
    return
  }
  func.func @transform_0(%arg0: i32, %arg1: i32) -> (i32, i32, i32) {
    %c0_i32 = arith.constant 0 : i32
    %c0_i32_0 = arith.constant 0 : i32
    return %arg0, %c0_i32, %arg1 : i32, i32, i32
  }
  func.func @transform_1(%arg0: i32, %arg1: i32) -> (i32, i32) {
    %c0_i32 = arith.constant 0 : i32
    %c0_i32_0 = arith.constant 0 : i32
    %c0_i32_1 = arith.constant 0 : i32
    return %c0_i32, %c0_i32_0 : i32, i32
  }
  func.func @transform_2(%arg0: i32, %arg1: i32) -> (i32, i32) {
    %c0_i32 = arith.constant 0 : i32
    %c0_i32_0 = arith.constant 0 : i32
    %c0_i32_1 = arith.constant 0 : i32
    return %c0_i32, %c0_i32_0 : i32, i32
  }
  func.func @transform_3(%arg0: i32, %arg1: i32) -> (i32, i32, i32) {
    %c0_i32 = arith.constant 0 : i32
    %c0_i32_0 = arith.constant 0 : i32
    return %arg0, %c0_i32, %arg1 : i32, i32, i32
  }
  func.func @transform_4(%arg0: i32, %arg1: i32) -> (i32, i32, i32) {
    %c0_i32 = arith.constant 0 : i32
    %c0_i32_0 = arith.constant 0 : i32
    return %arg0, %c0_i32, %arg1 : i32, i32, i32
  }
  func.func @transform_5(%arg0: i32, %arg1: i32) -> (i32, i32, i32) {
    %c0_i32 = arith.constant 0 : i32
    %c0_i32_0 = arith.constant 0 : i32
    return %arg0, %c0_i32, %arg1 : i32, i32, i32
  }
}

</mosaic_0001>

<llo_original>
// kernel: tpu_custom_call.1
$region0: #{tpu_custom_call.1}
  #allocation0 [shape = 'u32[]', space=smem, size = 0x4, offset = 0x4, fixed_abs, tag = 'smem constant byte address 0x4 - core index']
  #allocation1 [shape = 'u32[72,128]{1,0:T(1,128)}', space=vmem, size = 0x9000, scoped, tag = 'internal scratch']
  %s0 = inlined_call_operand.vmem [shape: f32[2,8,256], index: 0, kind: input, shape index: {}]
  %s1 = inlined_call_operand.vmem [shape: f32[32,8], index: 1, kind: input, shape index: {}]
  %s2 = inlined_call_operand.vmem [shape: f32[32,1], index: 2, kind: input, shape index: {}]
  %s3 = inlined_call_operand.hbm [shape: f32[2,8,256], index: 3, kind: output, shape index: {0}]
  %s4 = inlined_call_operand.hbm [shape: s32[2,1,256], index: 4, kind: output, shape index: {1}]
  %s5 = inlined_call_operand.hbm [shape: f32[2,1,256], index: 5, kind: output, shape index: {2}]
  %6 = xla_tuple %s3, %s4, %s5
  %s7 = sld [smem:[#allocation0]]
  $region61: #{tpu_custom_call.1} parent=0
    _
  %s9 = ssub.s32 1, %s7
  %s10 = scalar_select 0, %s9, %s7
  $region1: #{tpu_custom_call.1} parent=0
    #allocation2 [shape = 'u8[16384]{0}', space=vmem, size = 0x4000, scoped, tag = 'output window, operand 0']
    #allocation3 [shape = 's32[2]{0}', space=sflag, size = 0x8, scoped, tag = 'scoped memory for tpu_custom_call.1']
    #allocation4 [shape = 'u8[2048]{0}', space=vmem, size = 0x800, scoped, tag = 'output window, operand 1']
    #allocation5 [shape = 's32[2]{0}', space=sflag, size = 0x8, scoped, tag = 'scoped memory for tpu_custom_call.1']
    #allocation6 [shape = 'u8[2048]{0}', space=vmem, size = 0x800, scoped, tag = 'output window, operand 2']
    %11 = vsyncpa [#allocation3], 0
    %s12 = scalar_lea.sflag [#allocation3], 1
    %13 = vsyncpa %s12, 0
    %14 = vsyncpa [#allocation5], 0
    %s15 = scalar_lea.sflag [#allocation5], 1
    %16 = vsyncpa %s15, 0
    loop: start=0, step=1, limit=4
    $region2: #{tpu_custom_call.1} parent=1 // loop_pre_header
      _
    $region3: #{tpu_custom_call.1} parent=1 // loop_header
      %s18 = sphi 0, %s22
      %p19 = scmp.ge.s32.totalorder %s18, 4
      %s25 = sphi 0, %s37
      %s26 = sphi 0, %s33
      %s27 = sphi 0, %s25
      %s28 = sphi 0, %s26
      %s29 = sphi 0, %s27
      %s30 = sphi 0, %s28
      %s42 = sphi 0, %s44
      %s45 = sphi 0, %s42
      %s46 = sphi 0, %s45
      %s62 = sphi 0, %s46
      %s66 = sphi 0, %s66
      %s68 = sphi 0, %s66
      %s69 = sphi 0, %s68
      %s83 = sphi 0, %s69
      %s87 = sphi 0, %s87
      %s89 = sphi 0, %s87
      %s90 = sphi 0, %s89
      %s104 = sphi 0, %s90
      %s112 = sphi 0, %s114
      %s115 = sphi 0, %s112
      %s116 = sphi 0, %s115
      %s132 = sphi 0, %s116
      %s140 = sphi 0, %s142
      %s143 = sphi 0, %s140
      %s144 = sphi 0, %s143
      %s160 = sphi 0, %s144
      %s168 = sphi 0, %s170
      %s171 = sphi 0, %s168
      %s172 = sphi 0, %s171
      %s188 = sphi 0, %s172
    $region4: #{tpu_custom_call.1} parent=1 // loop_header_branch
      %21 = sbr.rel (%p19) target = $region8
    $region5: #{tpu_custom_call.1} parent=1 // loop_body
      %s23 = ssub.s32 %s18, 1
      %s24 = ssub.s32 %s18, 2
      %s31 = sadd.s32 1, %s26
      %p32 = scmp.ge.s32.totalorder %s31, 1
      %s33 = scalar_select %p32, 0, %s31
      %s34 = sadd.s32 1, %s25
      %s35 = scalar_select %p32, %s34, %s25
      %p36 = scmp.ge.s32.totalorder %s35, 2
      %s37 = scalar_select %p36, 0, %s35
      %s38 = ssub.s32 %s25, %s37
      %s39 = ssub.s32 %s26, %s33
      %s40 = sor.u32 %s38, %s39
      %p41 = scmp.eq.s32.totalorder %s40, 0
      %s43 = sadd.s32 %s42, 1
      %s44 = scalar_select %p41, %s42, %s43
      %p47 = pneg %p41
      %p48 = scmp.eq.s32.totalorder %s18, 1
      %p49 = por %p47, %p48
      %p50 = scmp.ne.s32.totalorder %s42, %s45
      %p51 = scmp.eq.s32.totalorder %s18, 0
      %p52 = por %p50, %p51
      %p53 = scmp.ne.s32.totalorder %s42, %s45
      %p54 = scmp.eq.s32.totalorder %s23, 1
      %p55 = por %p53, %p54
      %p56 = scmp.ne.s32.totalorder %s45, %s46
      %p57 = scmp.eq.s32.totalorder %s23, 0
      %p58 = por %p56, %p57
      %p59 = scmp.ne.s32.totalorder %s45, %s46
      %p60 = scmp.eq.s32.totalorder %s24, 1
      %p61 = por %p59, %p60
      %p63 = scmp.ne.s32.totalorder %s46, %s62
      %p64 = scmp.eq.s32.totalorder %s24, 0
      %p65 = por %p63, %p64
      %s67 = sadd.s32 %s66, 1
      %p70 = scmp.eq.s32.totalorder %s18, 1
      %p71 = scmp.ne.s32.totalorder %s66, %s68
      %p72 = scmp.eq.s32.totalorder %s18, 0
      %p73 = por %p71, %p72
      %p74 = scmp.ne.s32.totalorder %s66, %s68
      %p75 = scmp.eq.s32.totalorder %s23, 1
      %p76 = por %p74, %p75
      %p77 = scmp.ne.s32.totalorder %s68, %s69
      %p78 = scmp.eq.s32.totalorder %s23, 0
      %p79 = por %p77, %p78
      %p80 = scmp.ne.s32.totalorder %s68, %s69
      %p81 = scmp.eq.s32.totalorder %s24, 1
      %p82 = por %p80, %p81
      %p84 = scmp.ne.s32.totalorder %s69, %s83
      %p85 = scmp.eq.s32.totalorder %s24, 0
      %p86 = por %p84, %p85
      %s88 = sadd.s32 %s87, 1
      %p91 = scmp.eq.s32.totalorder %s18, 1
      %p92 = scmp.ne.s32.totalorder %s87, %s89
      %p93 = scmp.eq.s32.totalorder %s18, 0
      %p94 = por %p92, %p93
      %p95 = scmp.ne.s32.totalorder %s87, %s89
      %p96 = scmp.eq.s32.totalorder %s23, 1
      %p97 = por %p95, %p96
      %p98 = scmp.ne.s32.totalorder %s89, %s90
      %p99 = scmp.eq.s32.totalorder %s23, 0
      %p100 = por %p98, %p99
      %p101 = scmp.ne.s32.totalorder %s89, %s90
      %p102 = scmp.eq.s32.totalorder %s24, 1
      %p103 = por %p101, %p102
      %p105 = scmp.ne.s32.totalorder %s90, %s104
      %p106 = scmp.eq.s32.totalorder %s24, 0
      %p107 = por %p105, %p106
      %s108 = ssub.s32 %s25, %s37
      %s109 = ssub.s32 %s26, %s33
      %s110 = sor.u32 %s108, %s109
      %p111 = scmp.eq.s32.totalorder %s110, 0
      %s113 = sadd.s32 %s112, 1
      %s114 = scalar_select %p111, %s112, %s113
      %p117 = pneg %p111
      %p118 = scmp.eq.s32.totalorder %s18, 1
      %p119 = por %p117, %p118
      %p120 = scmp.ne.s32.totalorder %s112, %s115
      %p121 = scmp.eq.s32.totalorder %s18, 0
      %p122 = por %p120, %p121
      %p123 = scmp.ne.s32.totalorder %s112, %s115
      %p124 = scmp.eq.s32.totalorder %s23, 1
      %p125 = por %p123, %p124
      %p126 = scmp.ne.s32.totalorder %s115, %s116
      %p127 = scmp.eq.s32.totalorder %s23, 0
      %p128 = por %p126, %p127
      %p129 = scmp.ne.s32.totalorder %s115, %s116
      %p130 = scmp.eq.s32.totalorder %s24, 1
      %p131 = por %p129, %p130
      %p133 = scmp.ne.s32.totalorder %s116, %s132
      %p134 = scmp.eq.s32.totalorder %s24, 0
      %p135 = por %p133, %p134
      %s136 = ssub.s32 %s25, %s37
      %s137 = ssub.s32 %s26, %s33
      %s138 = sor.u32 %s136, %s137
      %p139 = scmp.eq.s32.totalorder %s138, 0
      %s141 = sadd.s32 %s140, 1
      %s142 = scalar_select %p139, %s140, %s141
      %p145 = pneg %p139
      %p146 = scmp.eq.s32.totalorder %s18, 1
      %p147 = por %p145, %p146
      %p148 = scmp.ne.s32.totalorder %s140, %s143
      %p149 = scmp.eq.s32.totalorder %s18, 0
      %p150 = por %p148, %p149
      %p151 = scmp.ne.s32.totalorder %s140, %s143
      %p152 = scmp.eq.s32.totalorder %s23, 1
      %p153 = por %p151, %p152
      %p154 = scmp.ne.s32.totalorder %s143, %s144
      %p155 = scmp.eq.s32.totalorder %s23, 0
      %p156 = por %p154, %p155
      %p157 = scmp.ne.s32.totalorder %s143, %s144
      %p158 = scmp.eq.s32.totalorder %s24, 1
      %p159 = por %p157, %p158
      %p161 = scmp.ne.s32.totalorder %s144, %s160
      %p162 = scmp.eq.s32.totalorder %s24, 0
      %p163 = por %p161, %p162
      %s164 = ssub.s32 %s25, %s37
      %s165 = ssub.s32 %s26, %s33
      %s166 = sor.u32 %s164, %s165
      %p167 = scmp.eq.s32.totalorder %s166, 0
      %s169 = sadd.s32 %s168, 1
      %s170 = scalar_select %p167, %s168, %s169
      %p173 = pneg %p167
      %p174 = scmp.eq.s32.totalorder %s18, 1
      %p175 = por %p173, %p174
      %p176 = scmp.ne.s32.totalorder %s168, %s171
      %p177 = scmp.eq.s32.totalorder %s18, 0
      %p178 = por %p176, %p177
      %p179 = scmp.ne.s32.totalorder %s168, %s171
      %p180 = scmp.eq.s32.totalorder %s23, 1
      %p181 = por %p179, %p180
      %p182 = scmp.ne.s32.totalorder %s171, %s172
      %p183 = scmp.eq.s32.totalorder %s23, 0
      %p184 = por %p182, %p183
      %p185 = scmp.ne.s32.totalorder %s171, %s172
      %p186 = scmp.eq.s32.totalorder %s24, 1
      %p187 = por %p185, %p186
      %p189 = scmp.ne.s32.totalorder %s172, %s188
      %p190 = scmp.eq.s32.totalorder %s24, 0
      %p191 = por %p189, %p190
      %p192 = scmp.le.s32.totalorder 1, %s18
      %p193 = scmp.lt.s32.totalorder %s18, 3
      %p194 = pnand %p192, %p193
      %p195 = pneg %p194
      // Predicated region
      $region9: #{tpu_custom_call.1} parent=5 // pred_check
        _
      $region10: #{tpu_custom_call.1} parent=5 // pred_check_branch
        %197 = sbr.rel (%p194) target = $region12
      $region11: #{tpu_custom_call.1} parent=5 // pred_region
        %s198 = ssub.s32 %s18, 1
        // Predicated region
        $region13: #{tpu_custom_call.1} parent=11 // pred_check
          %p199 = pneg %p79
        $region14: #{tpu_custom_call.1} parent=11 // pred_check_branch
          %201 = sbr.rel (%p199) target = $region16
        $region15: #{tpu_custom_call.1} parent=11 // pred_region
          _
        $region16: #{tpu_custom_call.1} parent=11 // pred_fallthru
          _
        // Predicated region
        $region17: #{tpu_custom_call.1} parent=11 // pred_check
          %p202 = pneg %p100
        $region18: #{tpu_custom_call.1} parent=11 // pred_check_branch
          %204 = sbr.rel (%p202) target = $region20
        $region19: #{tpu_custom_call.1} parent=11 // pred_region
          _
        $region20: #{tpu_custom_call.1} parent=11 // pred_fallthru
          _
      $region12: #{tpu_custom_call.1} parent=5 // pred_fallthru
        _
      %p205 = scmp.lt.s32.totalorder %s18, 2
      // Predicated region
      $region21: #{tpu_custom_call.1} parent=5 // pred_check
        %p206 = pneg %p205
      $region22: #{tpu_custom_call.1} parent=5 // pred_check_branch
        %208 = sbr.rel (%p206) target = $region24
      $region23: #{tpu_custom_call.1} parent=5 // pred_region
        // Predicated region
        $region25: #{tpu_custom_call.1} parent=23 // pred_check
          %p209 = pneg %p52
        $region26: #{tpu_custom_call.1} parent=23 // pred_check_branch
          %211 = sbr.rel (%p209) target = $region28
        $region27: #{tpu_custom_call.1} parent=23 // pred_region
          %s212 = smul.u32 2, %s26
          %p213 = scmp.lt.s32.totalorder %s25, 1
          %s214 = scalar_select %p213, %s25, 1
          %p215 = scmp.lt.s32.totalorder %s212, 1
          %s216 = scalar_select %p215, %s212, 1
          %s217 = smul.addr %s214, 2
          %s218 = sadd.s32 %s216, %s217
          %s219 = smul.addr %s218, 8
          %s220 = scalar_lea.vmem %s0, %s219
          %s221 = smul.u32 2, %s26
        $region28: #{tpu_custom_call.1} parent=23 // pred_fallthru
          _
      $region24: #{tpu_custom_call.1} parent=5 // pred_fallthru
        _
      %p222 = scmp.le.s32.totalorder 1, %s18
      %p223 = scmp.lt.s32.totalorder %s18, 3
      %p224 = pnand %p222, %p223
      %p225 = pneg %p224
      // Predicated region
      $region29: #{tpu_custom_call.1} parent=5 // pred_check
        _
      $region30: #{tpu_custom_call.1} parent=5 // pred_check_branch
        %227 = sbr.rel (%p224) target = $region32
      $region31: #{tpu_custom_call.1} parent=5 // pred_region
        %s228 = ssub.s32 %s18, 1
        %s229 = smul.u32 2, %s28
        %p230 = scmp.lt.s32.totalorder %s27, 1
        %s231 = scalar_select %p230, %s27, 1
        %p232 = scmp.lt.s32.totalorder %s229, 1
        %s233 = scalar_select %p232, %s229, 1
        %s234 = smul.addr %s231, 2
        %s235 = sadd.s32 %s233, %s234
        %s236 = smul.addr %s235, 8
        %s237 = scalar_lea.vmem %s0, %s236
        %p238 = pneg %p58
        %p239 = pneg %p55
        %p240 = pneg %p79
        %p241 = pneg %p76
        %p242 = pneg %p100
        %p243 = pneg %p97
        %p244 = pneg %p128
        %p245 = pneg %p125
        %s246 = sand.u32 %s115, 1
        %s247 = scalar_lea.sflag [#allocation3], %s246
        %s248 = sand.u32 %s115, 1
        %s249 = smul.addr %s248, 16
        %s250 = scalar_lea.vmem [#allocation2], %s249
        %p251 = pneg %p156
        %p252 = pneg %p153
        %s253 = sand.u32 %s23, 1
        %s254 = scalar_lea.sflag [#allocation5], %s253
        %s255 = sand.u32 %s143, 1
        %s256 = smul.addr %s255, 2
        %s257 = scalar_lea.vmem [#allocation4], %s256
        %p258 = pneg %p184
        %p259 = pneg %p181
        %s260 = sand.u32 %s23, 1
        %s261 = scalar_lea.sflag [#allocation5], %s260
        %s262 = sand.u32 %s171, 1
        %s263 = smul.addr %s262, 2
        %s264 = scalar_lea.vmem [#allocation6], %s263
        %s265 = smul.u32 2, %s28
        %p266 = scmp.lt.s32.totalorder %s27, 1
        %s267 = scalar_select %p266, %s27, 1
        %p268 = scmp.lt.s32.totalorder %s265, 1
        %s269 = scalar_select %p268, %s265, 1
        %s270 = smul.addr %s267, 2
        %s271 = sadd.s32 %s269, %s270
        %s272 = smul.addr %s271, 8
        %s273 = scalar_lea.vmem %s0, %s272
        %s274 = smul.u32 2, %s28
        %s275 = smul.u32 2, %s28
        %s276 = smul.u32 2, %s28
        %s277 = smul.u32 2, %s28
        %v278 = vld [vmem:[%s273] sm:$0xff]
        %v279 = vld [vmem:[%s273 + $0x8] sm:$0xff]
        %v280 = vld [vmem:[%s1] sm:$0xff]
        %v281 = vld [vmem:[%s1 + $0x8] sm:$0xff]
        %v282 = vld [vmem:[%s1 + $0x10] sm:$0xff]
        %v283 = vld [vmem:[%s1 + $0x18] sm:$0xff]
        %vm284 = vcmask 64512
        %v286 = vsel %vm284, %v280, 0
        %v289 = vsel %vm284, %v281, 0
        %v292 = vsel %vm284, %v282, 0
        %v295 = vsel %vm284, %v283, 0
        %297 = vmatpush.msra.mxu0 0.0
        %298 = vmatpush.msra.mxu0 0.0
        %299 = vmatpush.msra.mxu0 0.0
        %300 = vmatpush.msra.mxu0 0.0
        %301 = vmatpush.msra.mxu0 0.0
        %302 = vmatpush.msra.mxu0 0.0
        %303 = vmatpush.msra.mxu0 0.0
        %304 = vmatpush.msra.mxu0 0.0
        %305 = vmatpush.msra.mxu0 0.0
        %306 = vmatpush.msra.mxu0 0.0
        %307 = vmatpush.msra.mxu0 0.0
        %308 = vmatpush.msra.mxu0 0.0
        %309 = vmatpush.msra.mxu0 0.0
        %310 = vmatpush.msra.mxu0 0.0
        %311 = vmatpush.msra.mxu0 0.0
        %312 = vmatpush.msra.mxu0 %v278
        %313 = vmatmul.f32.gmra.mxu0 %v286
        %v314 = vpop.f32.mrf.mxu0
        %v315 = vadd.f32 0.0, %v314
        %316 = vmatmul.f32.gmra.mxu0 %v289
        %v317 = vpop.f32.mrf.mxu0
        %v318 = vadd.f32 0.0, %v317
        %319 = vmatmul.f32.gmra.mxu0 %v292
        %v320 = vpop.f32.mrf.mxu0
        %v321 = vadd.f32 0.0, %v320
        %322 = vmatmul.f32.gmra.mxu0 %v295
        %v323 = vpop.f32.mrf.mxu0
        %v324 = vadd.f32 0.0, %v323
        %325 = vdwg.mxu0
        %326 = vmatpush.msra.mxu0 0.0
        %327 = vmatpush.msra.mxu0 0.0
        %328 = vmatpush.msra.mxu0 0.0
        %329 = vmatpush.msra.mxu0 0.0
        %330 = vmatpush.msra.mxu0 0.0
        %331 = vmatpush.msra.mxu0 0.0
        %332 = vmatpush.msra.mxu0 0.0
        %333 = vmatpush.msra.mxu0 0.0
        %334 = vmatpush.msra.mxu0 0.0
        %335 = vmatpush.msra.mxu0 0.0
        %336 = vmatpush.msra.mxu0 0.0
        %337 = vmatpush.msra.mxu0 0.0
        %338 = vmatpush.msra.mxu0 0.0
        %339 = vmatpush.msra.mxu0 0.0
        %340 = vmatpush.msra.mxu0 0.0
        %341 = vmatpush.msra.mxu0 %v279
        %342 = vmatmul.f32.gmra.mxu0 %v286
        %v343 = vpop.f32.mrf.mxu0
        %v344 = vadd.f32 0.0, %v343
        %345 = vmatmul.f32.gmra.mxu0 %v289
        %v346 = vpop.f32.mrf.mxu0
        %v347 = vadd.f32 0.0, %v346
        %348 = vmatmul.f32.gmra.mxu0 %v292
        %v349 = vpop.f32.mrf.mxu0
        %v350 = vadd.f32 0.0, %v349
        %351 = vmatmul.f32.gmra.mxu0 %v295
        %v352 = vpop.f32.mrf.mxu0
        %v353 = vadd.f32 0.0, %v352
        %354 = vdwg.mxu0
        %v355 = vld [vmem:[%s2] sm:$0xff]
        %v356 = vld [vmem:[%s2 + $0x8] sm:$0xff]
        %v357 = vld [vmem:[%s2 + $0x10] sm:$0xff]
        %v358 = vld [vmem:[%s2 + $0x18] sm:$0xff]
        %360 = vset.pattern.permute.xlu0 0
        %361 = vperm.xlu0 %360, %v355
        %v362 = vpop.permute.xlu0 %361
        %365 = vset.pattern.permute.xlu0 0
        %366 = vperm.xlu0 %365, %v356
        %v367 = vpop.permute.xlu0 %366
        %370 = vset.pattern.permute.xlu0 0
        %371 = vperm.xlu0 %370, %v357
        %v372 = vpop.permute.xlu0 %371
        %375 = vset.pattern.permute.xlu0 0
        %376 = vperm.xlu0 %375, %v358
        %v377 = vpop.permute.xlu0 %376
        %v379 = vsub.f32 %v362, %v315
        %v380 = vsub.f32 %v362, %v344
        %v381 = vsub.f32 %v367, %v318
        %v382 = vsub.f32 %v367, %v347
        %v383 = vsub.f32 %v372, %v321
        %v384 = vsub.f32 %v372, %v350
        %v385 = vsub.f32 %v377, %v324
        %v386 = vsub.f32 %v377, %v353
        %v387 = vmin.f32 %v379, %v383
        %v388 = vmin.f32 %v381, %v385
        %v389 = vmin.f32 %v387, %v388
        %v390 = vrot.slane %v389, 4
        %v391 = vmin.f32 %v389, %v390
        %v392 = vrot.slane %v391, 2
        %v393 = vmin.f32 %v391, %v392
        %v394 = vrot.slane %v393, 1
        %v395 = vmin.f32 %v393, %v394
        %v396 = vmin.f32 %v380, %v384
        %v397 = vmin.f32 %v382, %v386
        %v398 = vmin.f32 %v396, %v397
        %v399 = vrot.slane %v398, 4
        %v400 = vmin.f32 %v398, %v399
        %v401 = vrot.slane %v400, 2
        %v402 = vmin.f32 %v400, %v401
        %v403 = vrot.slane %v402, 1
        %v404 = vmin.f32 %v402, %v403
        %v405 = vlaneseq
        %v406 = vshrl.u32 %v405, 7
        %v407 = vadd.s32 %v406, 8
        %v408 = vadd.s32 %v406, 16
        %v409 = vadd.s32 %v406, 24
        %vm410 = vcmp.eq.f32.partialorder %v379, %v395
        %vm411 = vcmp.eq.f32.partialorder %v380, %v404
        %vm412 = vcmp.eq.f32.partialorder %v381, %v395
        %vm413 = vcmp.eq.f32.partialorder %v382, %v404
        %vm414 = vcmp.eq.f32.partialorder %v383, %v395
        %vm415 = vcmp.eq.f32.partialorder %v384, %v404
        %vm416 = vcmp.eq.f32.partialorder %v385, %v395
        %vm417 = vcmp.eq.f32.partialorder %v386, %v404
        %v418 = vsel %vm410, %v406, 32
        %v419 = vsel %vm411, %v406, 32
        %v420 = vsel %vm412, %v407, 32
        %v421 = vsel %vm413, %v407, 32
        %v422 = vsel %vm414, %v408, 32
        %v423 = vsel %vm415, %v408, 32
        %v424 = vsel %vm416, %v409, 32
        %v425 = vsel %vm417, %v409, 32
        %vm426 = vcmp.lt.s32.totalorder %v418, %v422
        %v427 = vsel %vm426, %v418, %v422
        %vm428 = vcmp.lt.s32.totalorder %v420, %v424
        %v429 = vsel %vm428, %v420, %v424
        %vm430 = vcmp.lt.s32.totalorder %v427, %v429
        %v431 = vsel %vm430, %v427, %v429
        %v432 = vrot.slane %v431, 4
        %vm433 = vcmp.lt.s32.totalorder %v431, %v432
        %v434 = vsel %vm433, %v431, %v432
        %v435 = vrot.slane %v434, 2
        %vm436 = vcmp.lt.s32.totalorder %v434, %v435
        %v437 = vsel %vm436, %v434, %v435
        %v438 = vrot.slane %v437, 1
        %vm439 = vcmp.lt.s32.totalorder %v437, %v438
        %v440 = vsel %vm439, %v437, %v438
        %vm441 = vcmp.lt.s32.totalorder %v419, %v423
        %v442 = vsel %vm441, %v419, %v423
        %vm443 = vcmp.lt.s32.totalorder %v421, %v425
        %v444 = vsel %vm443, %v421, %v425
        %vm445 = vcmp.lt.s32.totalorder %v442, %v444
        %v446 = vsel %vm445, %v442, %v444
        %v447 = vrot.slane %v446, 4
        %vm448 = vcmp.lt.s32.totalorder %v446, %v447
        %v449 = vsel %vm448, %v446, %v447
        %v450 = vrot.slane %v449, 2
        %vm451 = vcmp.lt.s32.totalorder %v449, %v450
        %v452 = vsel %vm451, %v449, %v450
        %v453 = vrot.slane %v452, 1
        %vm454 = vcmp.lt.s32.totalorder %v452, %v453
        %v455 = vsel %vm454, %v452, %v453
        %vm456 = vcmp.eq.s32.totalorder %v406, %v440
        %vm457 = vcmp.eq.s32.totalorder %v406, %v455
        %vm458 = vcmp.eq.s32.totalorder %v407, %v440
        %vm459 = vcmp.eq.s32.totalorder %v407, %v455
        %vm460 = vcmp.eq.s32.totalorder %v408, %v440
        %vm461 = vcmp.eq.s32.totalorder %v408, %v455
        %vm462 = vcmp.eq.s32.totalorder %v409, %v440
        %vm463 = vcmp.eq.s32.totalorder %v409, %v455
        %v464 = vsel %vm456, 1, 0
        %v465 = vsel %vm457, 1, 0
        %v466 = vsel %vm458, 1, 0
        %v467 = vsel %vm459, 1, 0
        %v468 = vsel %vm460, 1, 0
        %v469 = vsel %vm461, 1, 0
        %v470 = vsel %vm462, 1, 0
        %v471 = vsel %vm463, 1, 0
        %v472 = vcvt.s32.f32 %v464
        %v473 = vcvt.s32.f32 %v465
        %v474 = vcvt.s32.f32 %v466
        %v475 = vcvt.s32.f32 %v467
        %v476 = vcvt.s32.f32 %v468
        %v477 = vcvt.s32.f32 %v469
        %v478 = vcvt.s32.f32 %v470
        %v479 = vcvt.s32.f32 %v471
        %480 = vxpose.xlu0.b32.start [1/16] %v280, 128
        %481 = vxpose.xlu0.b32.cont [2/16] %v281, 128
        %482 = vxpose.xlu0.b32.cont [3/16] %v282, 128
        %483 = vxpose.xlu0.b32.cont [4/16] %v283, 128
        %484 = vxpose.xlu0.b32.cont [5/16] 0.0, 128
        %485 = vxpose.xlu0.b32.cont [6/16] 0.0, 128
        %486 = vxpose.xlu0.b32.cont [7/16] 0.0, 128
        %487 = vxpose.xlu0.b32.cont [8/16] 0.0, 128
        %488 = vxpose.xlu0.b32.cont [9/16] 0.0, 128
        %489 = vxpose.xlu0.b32.cont [10/16] 0.0, 128
        %490 = vxpose.xlu0.b32.cont [11/16] 0.0, 128
        %491 = vxpose.xlu0.b32.cont [12/16] 0.0, 128
        %492 = vxpose.xlu0.b32.cont [13/16] 0.0, 128
        %493 = vxpose.xlu0.b32.cont [14/16] 0.0, 128
        %494 = vxpose.xlu0.b32.cont [15/16] 0.0, 128
        %495 = vxpose.xlu0.b32.end [16/16] 0.0, 128
        %v496 = vpop.trf.xlu0
        %v497 = vpop.trf.xlu0
        %v498 = vpop.trf.xlu0
        %v499 = vpop.trf.xlu0
        %v500 = vpop.trf.xlu0
        %v501 = vpop.trf.xlu0
        %v502 = vpop.trf.xlu0
        %v503 = vpop.trf.xlu0
        %v504 = vpop.trf.xlu0
        %v505 = vpop.trf.xlu0
        %v506 = vpop.trf.xlu0
        %v507 = vpop.trf.xlu0
        %v508 = vpop.trf.xlu0
        %v509 = vpop.trf.xlu0
        %v510 = vpop.trf.xlu0
        %v511 = vpop.trf.xlu0
        %vm512 = vcmask 261120
        %v514 = vsel %vm512, %v496, 0
        %516 = vmatpush.msra.mxu0 0.0
        %517 = vmatpush.msra.mxu0 0.0
        %518 = vmatpush.msra.mxu0 0.0
        %519 = vmatpush.msra.mxu0 0.0
        %520 = vmatpush.msra.mxu0 0.0
        %521 = vmatpush.msra.mxu0 0.0
        %522 = vmatpush.msra.mxu0 0.0
        %523 = vmatpush.msra.mxu0 0.0
        %524 = vmatpush.msra.mxu0 0.0
        %525 = vmatpush.msra.mxu0 0.0
        %526 = vmatpush.msra.mxu0 0.0
        %527 = vmatpush.msra.mxu0 0.0
        %528 = vmatpush.msra.mxu0 %v478
        %529 = vmatpush.msra.mxu0 %v476
        %530 = vmatpush.msra.mxu0 %v474
        %531 = vmatpush.msra.mxu0 %v472
        %532 = vmatmul.f32.gmra.mxu0 %v514
        %v533 = vpop.f32.mrf.mxu0
        %v534 = vadd.f32 0.0, %v533
        %535 = vdwg.mxu0
        %536 = vmatpush.msra.mxu0 0.0
        %537 = vmatpush.msra.mxu0 0.0
        %538 = vmatpush.msra.mxu0 0.0
        %539 = vmatpush.msra.mxu0 0.0
        %540 = vmatpush.msra.mxu0 0.0
        %541 = vmatpush.msra.mxu0 0.0
        %542 = vmatpush.msra.mxu0 0.0
        %543 = vmatpush.msra.mxu0 0.0
        %544 = vmatpush.msra.mxu0 0.0
        %545 = vmatpush.msra.mxu0 0.0
        %546 = vmatpush.msra.mxu0 0.0
        %547 = vmatpush.msra.mxu0 0.0
        %548 = vmatpush.msra.mxu0 %v479
        %549 = vmatpush.msra.mxu0 %v477
        %550 = vmatpush.msra.mxu0 %v475
        %551 = vmatpush.msra.mxu0 %v473
        %552 = vmatmul.f32.gmra.mxu0 %v514
        %v553 = vpop.f32.mrf.mxu0
        %v554 = vadd.f32 0.0, %v553
        %555 = vdwg.mxu0
        %556 = vst [vmem:[%s250] sm:$0xff] %v534
        %557 = vst [vmem:[%s250 + $0x8] sm:$0xff] %v554
        %v558 = vrot.slane %v455, 7
        %vm559 = vcmask 1040384
        %v560 = vsel %vm559, %v440, %v558
        %v561 = vlaneseq
        %vm562 = vcmp.ge.s32.totalorder %v561, 0
        %vm563 = vcmp.lt.s32.totalorder %v561, 256
        %vm564 = vmand %vm562, %vm563
        %565 = vst.msk [vmem:[%s257] sm:$0x3] %vm564, %v560
        %v566 = vsub.f32 %v534, %v278
        %v567 = vsub.f32 %v554, %v279
        %v568 = vmul.f32 %v566, %v566
        %v569 = vmul.f32 %v567, %v567
        %v570 = vrot.slane %v568, 4
        %v571 = vadd.f32 %v568, %v570
        %v572 = vrot.slane %v571, 2
        %v573 = vadd.f32 %v571, %v572
        %v574 = vrot.slane %v573, 1
        %v575 = vadd.f32 %v573, %v574
        %v576 = vrot.slane %v569, 4
        %v577 = vadd.f32 %v569, %v576
        %v578 = vrot.slane %v577, 2
        %v579 = vadd.f32 %v577, %v578
        %v580 = vrot.slane %v579, 1
        %v581 = vadd.f32 %v579, %v580
        %v584 = vrot.slane %v581, 7
        %v585 = vsel %vm559, %v575, %v584
        %587 = vst.msk [vmem:[%s264] sm:$0x3] %vm564, %v585
        %s588 = sand.u32 %s115, 1
        %s589 = scalar_lea.sflag [#allocation3], %s588
        %s590 = sand.u32 %s115, 1
        %s591 = smul.addr %s590, 16
        %s592 = scalar_lea.vmem [#allocation2], %s591
        %s593 = sand.u32 %s23, 1
        %s594 = scalar_lea.sflag [#allocation5], %s593
        %s595 = sand.u32 %s143, 1
        %s596 = smul.addr %s595, 2
        %s597 = scalar_lea.vmem [#allocation4], %s596
        %s598 = sand.u32 %s23, 1
        %s599 = scalar_lea.sflag [#allocation5], %s598
        %s600 = sand.u32 %s171, 1
        %s601 = smul.addr %s600, 2
        %s602 = scalar_lea.vmem [#allocation6], %s601
        // Predicated region
        $region33: #{tpu_custom_call.1} parent=31 // pred_check
          %p603 = pneg %p125
        $region34: #{tpu_custom_call.1} parent=31 // pred_check_branch
          %605 = sbr.rel (%p603) target = $region36
        $region35: #{tpu_custom_call.1} parent=31 // pred_region
          %s606 = smul.u32 2, %s28
          %608 = vsyncadd %s589, 0
          %s609 = smul.addr %s27, 2
          %s610 = sadd.s32 %s606, %s609
          %s611 = smul.addr %s610, 8
          %s612 = scalar_lea.hbm %s3, %s611
          %s614 = sshll.u32 %s592, 4
          %s615 = int_to_ptr.vmem [resolvable:$true] %s614
          %s616 = sshll.u32 %s612, 4
          %s617 = int_to_ptr.hbm [resolvable:$true] %s616
          %619 = dma.vmem_to_hbm [thread:$0]  %s615, 256, %s617, %s589
        $region36: #{tpu_custom_call.1} parent=31 // pred_fallthru
          _
        // Predicated region
        $region37: #{tpu_custom_call.1} parent=31 // pred_check
          %p620 = pneg %p153
        $region38: #{tpu_custom_call.1} parent=31 // pred_check_branch
          %622 = sbr.rel (%p620) target = $region40
        $region39: #{tpu_custom_call.1} parent=31 // pred_region
          %s623 = smul.u32 2, %s28
          %625 = vsyncadd %s594, 0
          %s626 = smul.addr %s27, 2
          %s627 = sadd.s32 %s623, %s626
          %s628 = scalar_lea.hbm %s4, %s627
          %s630 = sshll.u32 %s597, 4
          %s631 = int_to_ptr.vmem [resolvable:$true] %s630
          %s632 = sshll.u32 %s628, 4
          %s633 = int_to_ptr.hbm [resolvable:$true] %s632
          %635 = dma.vmem_to_hbm [thread:$0]  %s631, 32, %s633, %s594
        $region40: #{tpu_custom_call.1} parent=31 // pred_fallthru
          _
        // Predicated region
        $region41: #{tpu_custom_call.1} parent=31 // pred_check
          %p636 = pneg %p181
        $region42: #{tpu_custom_call.1} parent=31 // pred_check_branch
          %638 = sbr.rel (%p636) target = $region44
        $region43: #{tpu_custom_call.1} parent=31 // pred_region
          %s639 = smul.u32 2, %s28
          %641 = vsyncadd %s599, 0
          %s642 = smul.addr %s27, 2
          %s643 = sadd.s32 %s639, %s642
          %s644 = scalar_lea.hbm %s5, %s643
          %s646 = sshll.u32 %s602, 4
          %s647 = int_to_ptr.vmem [resolvable:$true] %s646
          %s648 = sshll.u32 %s644, 4
          %s649 = int_to_ptr.hbm [resolvable:$true] %s648
          %651 = dma.vmem_to_hbm [thread:$0]  %s647, 32, %s649, %s599
        $region44: #{tpu_custom_call.1} parent=31 // pred_fallthru
          _
      $region32: #{tpu_custom_call.1} parent=5 // pred_fallthru
        _
      %p652 = scmp.le.s32.totalorder 2, %s18
      // Predicated region
      $region45: #{tpu_custom_call.1} parent=5 // pred_check
        %p653 = pneg %p652
      $region46: #{tpu_custom_call.1} parent=5 // pred_check_branch
        %655 = sbr.rel (%p653) target = $region48
      $region47: #{tpu_custom_call.1} parent=5 // pred_region
        %s656 = ssub.s32 %s18, 2
        // Predicated region
        $region49: #{tpu_custom_call.1} parent=47 // pred_check
          %p657 = pneg %p131
        $region50: #{tpu_custom_call.1} parent=47 // pred_check_branch
          %659 = sbr.rel (%p657) target = $region52
        $region51: #{tpu_custom_call.1} parent=47 // pred_region
          %s660 = sand.u32 %s116, 1
          %s661 = scalar_lea.sflag [#allocation3], %s660
          %s662 = sand.u32 %s116, 1
          %s663 = smul.addr %s662, 16
          %s664 = scalar_lea.vmem [#allocation2], %s663
          %666 = dma.done %s661, 256
        $region52: #{tpu_custom_call.1} parent=47 // pred_fallthru
          _
        // Predicated region
        $region53: #{tpu_custom_call.1} parent=47 // pred_check
          %p667 = pneg %p159
        $region54: #{tpu_custom_call.1} parent=47 // pred_check_branch
          %669 = sbr.rel (%p667) target = $region56
        $region55: #{tpu_custom_call.1} parent=47 // pred_region
          %s670 = sand.u32 %s24, 1
          %s671 = scalar_lea.sflag [#allocation5], %s670
          %s672 = sand.u32 %s144, 1
          %s673 = smul.addr %s672, 2
          %s674 = scalar_lea.vmem [#allocation4], %s673
          %676 = dma.done %s671, 32
        $region56: #{tpu_custom_call.1} parent=47 // pred_fallthru
          _
        // Predicated region
        $region57: #{tpu_custom_call.1} parent=47 // pred_check
          %p677 = pneg %p187
        $region58: #{tpu_custom_call.1} parent=47 // pred_check_branch
          %679 = sbr.rel (%p677) target = $region60
        $region59: #{tpu_custom_call.1} parent=47 // pred_region
          %s680 = sand.u32 %s24, 1
          %s681 = scalar_lea.sflag [#allocation5], %s680
          %s682 = sand.u32 %s172, 1
          %s683 = smul.addr %s682, 2
          %s684 = scalar_lea.vmem [#allocation6], %s683
          %686 = dma.done %s681, 32
        $region60: #{tpu_custom_call.1} parent=47 // pred_fallthru
          _
      $region48: #{tpu_custom_call.1} parent=5 // pred_fallthru
        _
    $region6: #{tpu_custom_call.1} parent=1 // loop_footer
      %s22 = sadd.s32 1, %s18
    $region7: #{tpu_custom_call.1} parent=1 // loop_footer_branch
      %17 = sbr.rel target = $region3
    $region8: #{tpu_custom_call.1} parent=1 // loop_exit
      _
    %687 = vsyncpa [#allocation3], 1
    %s688 = scalar_lea.sflag [#allocation3], 1
    %689 = vsyncpa %s688, 1
    %690 = vsyncpa [#allocation5], 1
    %s691 = scalar_lea.sflag [#allocation5], 1
    %692 = vsyncpa %s691, 1

// kernel: tpu_custom_call.1
$region0: #{tpu_custom_call.1}
  #allocation0 [shape = 'u32[]', space=smem, size = 0x4, offset = 0x4, fixed_abs, tag = 'smem constant byte address 0x4 - core index']
  #allocation1 [shape = 'u32[72,128]{1,0:T(1,128)}', space=vmem, size = 0x9000, scoped, tag = 'internal scratch']
  %s0 = inlined_call_operand.vmem [shape: f32[2,8,256], index: 0, kind: input, shape index: {}]
  %s1 = inlined_call_operand.vmem [shape: f32[32,8], index: 1, kind: input, shape index: {}]
  %s2 = inlined_call_operand.vmem [shape: f32[32,1], index: 2, kind: input, shape index: {}]
  %s3 = inlined_call_operand.hbm [shape: f32[2,8,256], index: 3, kind: output, shape index: {0}]
  %s4 = inlined_call_operand.hbm [shape: s32[2,1,256], index: 4, kind: output, shape index: {1}]
  %s5 = inlined_call_operand.hbm [shape: f32[2,1,256], index: 5, kind: output, shape index: {2}]
  %6 = xla_tuple %s3, %s4, %s5
  %s7 = sld [smem:[#allocation0]]
  $region61: #{tpu_custom_call.1} parent=0
    _
  %s9 = ssub.s32 1, %s7
  %s10 = scalar_select 0, %s9, %s7
  $region1: #{tpu_custom_call.1} parent=0
    #allocation2 [shape = 'u8[16384]{0}', space=vmem, size = 0x4000, scoped, tag = 'output window, operand 0']
    #allocation3 [shape = 's32[2]{0}', space=sflag, size = 0x8, scoped, tag = 'scoped memory for tpu_custom_call.1']
    #allocation4 [shape = 'u8[2048]{0}', space=vmem, size = 0x800, scoped, tag = 'output window, operand 1']
    #allocation5 [shape = 's32[2]{0}', space=sflag, size = 0x8, scoped, tag = 'scoped memory for tpu_custom_call.1']
    #allocation6 [shape = 'u8[2048]{0}', space=vmem, size = 0x800, scoped, tag = 'output window, operand 2']
    %11 = vsyncpa [#allocation3], 0
    %s12 = scalar_lea.sflag [#allocation3], 1
    %13 = vsyncpa %s12, 0
    %14 = vsyncpa [#allocation5], 0
    %s15 = scalar_lea.sflag [#allocation5], 1
    %16 = vsyncpa %s15, 0
    loop: start=0, step=1, limit=4
    $region2: #{tpu_custom_call.1} parent=1 // loop_pre_header
      _
    $region3: #{tpu_custom_call.1} parent=1 // loop_header
      %s18 = sphi 0, %s22
      %p19 = scmp.ge.s32.totalorder %s18, 4
      %s25 = sphi 0, %s37
      %s26 = sphi 0, %s33
      %s27 = sphi 0, %s25
      %s28 = sphi 0, %s26
      %s29 = sphi 0, %s27
      %s30 = sphi 0, %s28
      %s42 = sphi 0, %s44
      %s45 = sphi 0, %s42
      %s46 = sphi 0, %s45
      %s62 = sphi 0, %s46
      %s66 = sphi 0, %s66
      %s68 = sphi 0, %s66
      %s69 = sphi 0, %s68
      %s83 = sphi 0, %s69
      %s87 = sphi 0, %s87
      %s89 = sphi 0, %s87
      %s90 = sphi 0, %s89
      %s104 = sphi 0, %s90
      %s112 = sphi 0, %s114
      %s115 = sphi 0, %s112
      %s116 = sphi 0, %s115
      %s132 = sphi 0, %s116
      %s140 = sphi 0, %s142
      %s143 = sphi 0, %s140
      %s144 = sphi 0, %s143
      %s160 = sphi 0, %s144
      %s168 = sphi 0, %s170
      %s171 = sphi 0, %s168
      %s172 = sphi 0, %s171
      %s188 = sphi 0, %s172
    $region4: #{tpu_custom_call.1} parent=1 // loop_header_branch
      %21 = sbr.rel (%p19) target = $region8
    $region5: #{tpu_custom_call.1} parent=1 // loop_body
      %s23 = ssub.s32 %s18, 1
      %s24 = ssub.s32 %s18, 2
      %s31 = sadd.s32 1, %s26
      %p32 = scmp.ge.s32.totalorder %s31, 1
      %s33 = scalar_select %p32, 0, %s31
      %s34 = sadd.s32 1, %s25
      %s35 = scalar_select %p32, %s34, %s25
      %p36 = scmp.ge.s32.totalorder %s35, 2
      %s37 = scalar_select %p36, 0, %s35
      %s38 = ssub.s32 %s25, %s37
      %s39 = ssub.s32 %s26, %s33
      %s40 = sor.u32 %s38, %s39
      %p41 = scmp.eq.s32.totalorder %s40, 0
      %s43 = sadd.s32 %s42, 1
      %s44 = scalar_select %p41, %s42, %s43
      %p47 = pneg %p41
      %p48 = scmp.eq.s32.totalorder %s18, 1
      %p49 = por %p47, %p48
      %p50 = scmp.ne.s32.totalorder %s42, %s45
      %p51 = scmp.eq.s32.totalorder %s18, 0
      %p52 = por %p50, %p51
      %p53 = scmp.ne.s32.totalorder %s42, %s45
      %p54 = scmp.eq.s32.totalorder %s23, 1
      %p55 = por %p53, %p54
      %p56 = scmp.ne.s32.totalorder %s45, %s46
      %p57 = scmp.eq.s32.totalorder %s23, 0
      %p58 = por %p56, %p57
      %p59 = scmp.ne.s32.totalorder %s45, %s46
      %p60 = scmp.eq.s32.totalorder %s24, 1
      %p61 = por %p59, %p60
      %p63 = scmp.ne.s32.totalorder %s46, %s62
      %p64 = scmp.eq.s32.totalorder %s24, 0
      %p65 = por %p63, %p64
      %s67 = sadd.s32 %s66, 1
      %p70 = scmp.eq.s32.totalorder %s18, 1
      %p71 = scmp.ne.s32.totalorder %s66, %s68
      %p72 = scmp.eq.s32.totalorder %s18, 0
      %p73 = por %p71, %p72
      %p74 = scmp.ne.s32.totalorder %s66, %s68
      %p75 = scmp.eq.s32.totalorder %s23, 1
      %p76 = por %p74, %p75
      %p77 = scmp.ne.s32.totalorder %s68, %s69
      %p78 = scmp.eq.s32.totalorder %s23, 0
      %p79 = por %p77, %p78
      %p80 = scmp.ne.s32.totalorder %s68, %s69
      %p81 = scmp.eq.s32.totalorder %s24, 1
      %p82 = por %p80, %p81
      %p84 = scmp.ne.s32.totalorder %s69, %s83
      %p85 = scmp.eq.s32.totalorder %s24, 0
      %p86 = por %p84, %p85
      %s88 = sadd.s32 %s87, 1
      %p91 = scmp.eq.s32.totalorder %s18, 1
      %p92 = scmp.ne.s32.totalorder %s87, %s89
      %p93 = scmp.eq.s32.totalorder %s18, 0
      %p94 = por %p92, %p93
      %p95 = scmp.ne.s32.totalorder %s87, %s89
      %p96 = scmp.eq.s32.totalorder %s23, 1
      %p97 = por %p95, %p96
      %p98 = scmp.ne.s32.totalorder %s89, %s90
      %p99 = scmp.eq.s32.totalorder %s23, 0
      %p100 = por %p98, %p99
      %p101 = scmp.ne.s32.totalorder %s89, %s90
      %p102 = scmp.eq.s32.totalorder %s24, 1
      %p103 = por %p101, %p102
      %p105 = scmp.ne.s32.totalorder %s90, %s104
      %p106 = scmp.eq.s32.totalorder %s24, 0
      %p107 = por %p105, %p106
      %s108 = ssub.s32 %s25, %s37
      %s109 = ssub.s32 %s26, %s33
      %s110 = sor.u32 %s108, %s109
      %p111 = scmp.eq.s32.totalorder %s110, 0
      %s113 = sadd.s32 %s112, 1
      %s114 = scalar_select %p111, %s112, %s113
      %p117 = pneg %p111
      %p118 = scmp.eq.s32.totalorder %s18, 1
      %p119 = por %p117, %p118
      %p120 = scmp.ne.s32.totalorder %s112, %s115
      %p121 = scmp.eq.s32.totalorder %s18, 0
      %p122 = por %p120, %p121
      %p123 = scmp.ne.s32.totalorder %s112, %s115
      %p124 = scmp.eq.s32.totalorder %s23, 1
      %p125 = por %p123, %p124
      %p126 = scmp.ne.s32.totalorder %s115, %s116
      %p127 = scmp.eq.s32.totalorder %s23, 0
      %p128 = por %p126, %p127
      %p129 = scmp.ne.s32.totalorder %s115, %s116
      %p130 = scmp.eq.s32.totalorder %s24, 1
      %p131 = por %p129, %p130
      %p133 = scmp.ne.s32.totalorder %s116, %s132
      %p134 = scmp.eq.s32.totalorder %s24, 0
      %p135 = por %p133, %p134
      %s136 = ssub.s32 %s25, %s37
      %s137 = ssub.s32 %s26, %s33
      %s138 = sor.u32 %s136, %s137
      %p139 = scmp.eq.s32.totalorder %s138, 0
      %s141 = sadd.s32 %s140, 1
      %s142 = scalar_select %p139, %s140, %s141
      %p145 = pneg %p139
      %p146 = scmp.eq.s32.totalorder %s18, 1
      %p147 = por %p145, %p146
      %p148 = scmp.ne.s32.totalorder %s140, %s143
      %p149 = scmp.eq.s32.totalorder %s18, 0
      %p150 = por %p148, %p149
      %p151 = scmp.ne.s32.totalorder %s140, %s143
      %p152 = scmp.eq.s32.totalorder %s23, 1
      %p153 = por %p151, %p152
      %p154 = scmp.ne.s32.totalorder %s143, %s144
      %p155 = scmp.eq.s32.totalorder %s23, 0
      %p156 = por %p154, %p155
      %p157 = scmp.ne.s32.totalorder %s143, %s144
      %p158 = scmp.eq.s32.totalorder %s24, 1
      %p159 = por %p157, %p158
      %p161 = scmp.ne.s32.totalorder %s144, %s160
      %p162 = scmp.eq.s32.totalorder %s24, 0
      %p163 = por %p161, %p162
      %s164 = ssub.s32 %s25, %s37
      %s165 = ssub.s32 %s26, %s33
      %s166 = sor.u32 %s164, %s165
      %p167 = scmp.eq.s32.totalorder %s166, 0
      %s169 = sadd.s32 %s168, 1
      %s170 = scalar_select %p167, %s168, %s169
      %p173 = pneg %p167
      %p174 = scmp.eq.s32.totalorder %s18, 1
      %p175 = por %p173, %p174
      %p176 = scmp.ne.s32.totalorder %s168, %s171
      %p177 = scmp.eq.s32.totalorder %s18, 0
      %p178 = por %p176, %p177
      %p179 = scmp.ne.s32.totalorder %s168, %s171
      %p180 = scmp.eq.s32.totalorder %s23, 1
      %p181 = por %p179, %p180
      %p182 = scmp.ne.s32.totalorder %s171, %s172
      %p183 = scmp.eq.s32.totalorder %s23, 0
      %p184 = por %p182, %p183
      %p185 = scmp.ne.s32.totalorder %s171, %s172
      %p186 = scmp.eq.s32.totalorder %s24, 1
      %p187 = por %p185, %p186
      %p189 = scmp.ne.s32.totalorder %s172, %s188
      %p190 = scmp.eq.s32.totalorder %s24, 0
      %p191 = por %p189, %p190
      %p192 = scmp.le.s32.totalorder 1, %s18
      %p193 = scmp.lt.s32.totalorder %s18, 3
      %p194 = pnand %p192, %p193
      %p195 = pneg %p194
      // Predicated region
      $region9: #{tpu_custom_call.1} parent=5 // pred_check
        _
      $region10: #{tpu_custom_call.1} parent=5 // pred_check_branch
        %197 = sbr.rel (%p194) target = $region12
      $region11: #{tpu_custom_call.1} parent=5 // pred_region
        %s198 = ssub.s32 %s18, 1
        // Predicated region
        $region13: #{tpu_custom_call.1} parent=11 // pred_check
          %p199 = pneg %p79
        $region14: #{tpu_custom_call.1} parent=11 // pred_check_branch
          %201 = sbr.rel (%p199) target = $region16
        $region15: #{tpu_custom_call.1} parent=11 // pred_region
          _
        $region16: #{tpu_custom_call.1} parent=11 // pred_fallthru
          _
        // Predicated region
        $region17: #{tpu_custom_call.1} parent=11 // pred_check
          %p202 = pneg %p100
        $region18: #{tpu_custom_call.1} parent=11 // pred_check_branch
          %204 = sbr.rel (%p202) target = $region20
        $region19: #{tpu_custom_call.1} parent=11 // pred_region
          _
        $region20: #{tpu_custom_call.1} parent=11 // pred_fallthru
          _
      $region12: #{tpu_custom_call.1} parent=5 // pred_fallthru
        _
      %p205 = scmp.lt.s32.totalorder %s18, 2
      // Predicated region
      $region21: #{tpu_custom_call.1} parent=5 // pred_check
        %p206 = pneg %p205
      $region22: #{tpu_custom_call.1} parent=5 // pred_check_branch
        %208 = sbr.rel (%p206) target = $region24
      $region23: #{tpu_custom_call.1} parent=5 // pred_region
        // Predicated region
        $region25: #{tpu_custom_call.1} parent=23 // pred_check
          %p209 = pneg %p52
        $region26: #{tpu_custom_call.1} parent=23 // pred_check_branch
          %211 = sbr.rel (%p209) target = $region28
        $region27: #{tpu_custom_call.1} parent=23 // pred_region
          %s212 = smul.u32 2, %s26
          %p213 = scmp.lt.s32.totalorder %s25, 1
          %s214 = scalar_select %p213, %s25, 1
          %p215 = scmp.lt.s32.totalorder %s212, 1
          %s216 = scalar_select %p215, %s212, 1
          %s217 = smul.addr %s214, 2
          %s218 = sadd.s32 %s216, %s217
          %s219 = smul.addr %s218, 8
          %s220 = scalar_lea.vmem %s0, %s219
          %s221 = smul.u32 2, %s26
        $region28: #{tpu_custom_call.1} parent=23 // pred_fallthru
          _
      $region24: #{tpu_custom_call.1} parent=5 // pred_fallthru
        _
      %p222 = scmp.le.s32.totalorder 1, %s18
      %p223 = scmp.lt.s32.totalorder %s18, 3
      %p224 = pnand %p222, %p223
      %p225 = pneg %p224
      // Predicated region
      $region29: #{tpu_custom_call.1} parent=5 // pred_check
        _
      $region30: #{tpu_custom_call.1} parent=5 // pred_check_branch
        %227 = sbr.rel (%p224) target = $region32
      $region31: #{tpu_custom_call.1} parent=5 // pred_region
        %s228 = ssub.s32 %s18, 1
        %s229 = smul.u32 2, %s28
        %p230 = scmp.lt.s32.totalorder %s27, 1
        %s231 = scalar_select %p230, %s27, 1
        %p232 = scmp.lt.s32.totalorder %s229, 1
        %s233 = scalar_select %p232, %s229, 1
        %s234 = smul.addr %s231, 2
        %s235 = sadd.s32 %s233, %s234
        %s236 = smul.addr %s235, 8
        %s237 = scalar_lea.vmem %s0, %s236
        %p238 = pneg %p58
        %p239 = pneg %p55
        %p240 = pneg %p79
        %p241 = pneg %p76
        %p242 = pneg %p100
        %p243 = pneg %p97
        %p244 = pneg %p128
        %p245 = pneg %p125
        %s246 = sand.u32 %s115, 1
        %s247 = scalar_lea.sflag [#allocation3], %s246
        %s248 = sand.u32 %s115, 1
        %s249 = smul.addr %s248, 16
        %s250 = scalar_lea.vmem [#allocation2], %s249
        %p251 = pneg %p156
        %p252 = pneg %p153
        %s253 = sand.u32 %s23, 1
        %s254 = scalar_lea.sflag [#allocation5], %s253
        %s255 = sand.u32 %s143, 1
        %s256 = smul.addr %s255, 2
        %s257 = scalar_lea.vmem [#allocation4], %s256
        %p258 = pneg %p184
        %p259 = pneg %p181
        %s260 = sand.u32 %s23, 1
        %s261 = scalar_lea.sflag [#allocation5], %s260
        %s262 = sand.u32 %s171, 1
        %s263 = smul.addr %s262, 2
        %s264 = scalar_lea.vmem [#allocation6], %s263
        %s265 = smul.u32 2, %s28
        %p266 = scmp.lt.s32.totalorder %s27, 1
        %s267 = scalar_select %p266, %s27, 1
        %p268 = scmp.lt.s32.totalorder %s265, 1
        %s269 = scalar_select %p268, %s265, 1
        %s270 = smul.addr %s267, 2
        %s271 = sadd.s32 %s269, %s270
        %s272 = smul.addr %s271, 8
        %s273 = scalar_lea.vmem %s0, %s272
        %s274 = smul.u32 2, %s28
        %s275 = smul.u32 2, %s28
        %s276 = smul.u32 2, %s28
        %s277 = smul.u32 2, %s28
        %v278 = vld [vmem:[%s273] sm:$0xff]
        %v279 = vld [vmem:[%s273 + $0x8] sm:$0xff]
        %v280 = vld [vmem:[%s1] sm:$0xff]
        %v281 = vld [vmem:[%s1 + $0x8] sm:$0xff]
        %v282 = vld [vmem:[%s1 + $0x10] sm:$0xff]
        %v283 = vld [vmem:[%s1 + $0x18] sm:$0xff]
        %vm284 = vcmask 64512
        %v286 = vsel %vm284, %v280, 0
        %v289 = vsel %vm284, %v281, 0
        %v292 = vsel %vm284, %v282, 0
        %v295 = vsel %vm284, %v283, 0
        %297 = vmatpush.msra.mxu0 0.0
        %298 = vmatpush.msra.mxu0 0.0
        %299 = vmatpush.msra.mxu0 0.0
        %300 = vmatpush.msra.mxu0 0.0
        %301 = vmatpush.msra.mxu0 0.0
        %302 = vmatpush.msra.mxu0 0.0
        %303 = vmatpush.msra.mxu0 0.0
        %304 = vmatpush.msra.mxu0 0.0
        %305 = vmatpush.msra.mxu0 0.0
        %306 = vmatpush.msra.mxu0 0.0
        %307 = vmatpush.msra.mxu0 0.0
        %308 = vmatpush.msra.mxu0 0.0
        %309 = vmatpush.msra.mxu0 0.0
        %310 = vmatpush.msra.mxu0 0.0
        %311 = vmatpush.msra.mxu0 0.0
        %312 = vmatpush.msra.mxu0 %v278
        %313 = vmatmul.f32.gmra.mxu0 %v286
        %v314 = vpop.f32.mrf.mxu0
        %v315 = vadd.f32 0.0, %v314
        %316 = vmatmul.f32.gmra.mxu0 %v289
        %v317 = vpop.f32.mrf.mxu0
        %v318 = vadd.f32 0.0, %v317
        %319 = vmatmul.f32.gmra.mxu0 %v292
        %v320 = vpop.f32.mrf.mxu0
        %v321 = vadd.f32 0.0, %v320
        %322 = vmatmul.f32.gmra.mxu0 %v295
        %v323 = vpop.f32.mrf.mxu0
        %v324 = vadd.f32 0.0, %v323
        %325 = vdwg.mxu0
        %326 = vmatpush.msra.mxu0 0.0
        %327 = vmatpush.msra.mxu0 0.0
        %328 = vmatpush.msra.mxu0 0.0
        %329 = vmatpush.msra.mxu0 0.0
        %330 = vmatpush.msra.mxu0 0.0
        %331 = vmatpush.msra.mxu0 0.0
        %332 = vmatpush.msra.mxu0 0.0
        %333 = vmatpush.msra.mxu0 0.0
        %334 = vmatpush.msra.mxu0 0.0
        %335 = vmatpush.msra.mxu0 0.0
        %336 = vmatpush.msra.mxu0 0.0
        %337 = vmatpush.msra.mxu0 0.0
        %338 = vmatpush.msra.mxu0 0.0
        %339 = vmatpush.msra.mxu0 0.0
        %340 = vmatpush.msra.mxu0 0.0
        %341 = vmatpush.msra.mxu0 %v279
        %342 = vmatmul.f32.gmra.mxu0 %v286
        %v343 = vpop.f32.mrf.mxu0
        %v344 = vadd.f32 0.0, %v343
        %345 = vmatmul.f32.gmra.mxu0 %v289
        %v346 = vpop.f32.mrf.mxu0
        %v347 = vadd.f32 0.0, %v346
        %348 = vmatmul.f32.gmra.mxu0 %v292
        %v349 = vpop.f32.mrf.mxu0
        %v350 = vadd.f32 0.0, %v349
        %351 = vmatmul.f32.gmra.mxu0 %v295
        %v352 = vpop.f32.mrf.mxu0
        %v353 = vadd.f32 0.0, %v352
        %354 = vdwg.mxu0
        %v355 = vld [vmem:[%s2] sm:$0xff]
        %v356 = vld [vmem:[%s2 + $0x8] sm:$0xff]
        %v357 = vld [vmem:[%s2 + $0x10] sm:$0xff]
        %v358 = vld [vmem:[%s2 + $0x18] sm:$0xff]
        %360 = vset.pattern.permute.xlu0 0
        %361 = vperm.xlu0 %360, %v355
        %v362 = vpop.permute.xlu0 %361
        %365 = vset.pattern.permute.xlu0 0
        %366 = vperm.xlu0 %365, %v356
        %v367 = vpop.permute.xlu0 %366
        %370 = vset.pattern.permute.xlu0 0
        %371 = vperm.xlu0 %370, %v357
        %v372 = vpop.permute.xlu0 %371
        %375 = vset.pattern.permute.xlu0 0
        %376 = vperm.xlu0 %375, %v358
        %v377 = vpop.permute.xlu0 %376
        %v379 = vsub.f32 %v362, %v315
        %v380 = vsub.f32 %v362, %v344
        %v381 = vsub.f32 %v367, %v318
        %v382 = vsub.f32 %v367, %v347
        %v383 = vsub.f32 %v372, %v321
        %v384 = vsub.f32 %v372, %v350
        %v385 = vsub.f32 %v377, %v324
        %v386 = vsub.f32 %v377, %v353
        %v387 = vmin.f32 %v379, %v383
        %v388 = vmin.f32 %v381, %v385
        %v389 = vmin.f32 %v387, %v388
        %v390 = vrot.slane %v389, 4
        %v391 = vmin.f32 %v389, %v390
        %v392 = vrot.slane %v391, 2
        %v393 = vmin.f32 %v391, %v392
        %v394 = vrot.slane %v393, 1
        %v395 = vmin.f32 %v393, %v394
        %v396 = vmin.f32 %v380, %v384
        %v397 = vmin.f32 %v382, %v386
        %v398 = vmin.f32 %v396, %v397
        %v399 = vrot.slane %v398, 4
        %v400 = vmin.f32 %v398, %v399
        %v401 = vrot.slane %v400, 2
        %v402 = vmin.f32 %v400, %v401
        %v403 = vrot.slane %v402, 1
        %v404 = vmin.f32 %v402, %v403
        %v405 = vlaneseq
        %v406 = vshrl.u32 %v405, 7
        %v407 = vadd.s32 %v406, 8
        %v408 = vadd.s32 %v406, 16
        %v409 = vadd.s32 %v406, 24
        %vm410 = vcmp.eq.f32.partialorder %v379, %v395
        %vm411 = vcmp.eq.f32.partialorder %v380, %v404
        %vm412 = vcmp.eq.f32.partialorder %v381, %v395
        %vm413 = vcmp.eq.f32.partialorder %v382, %v404
        %vm414 = vcmp.eq.f32.partialorder %v383, %v395
        %vm415 = vcmp.eq.f32.partialorder %v384, %v404
        %vm416 = vcmp.eq.f32.partialorder %v385, %v395
        %vm417 = vcmp.eq.f32.partialorder %v386, %v404
        %v418 = vsel %vm410, %v406, 32
        %v419 = vsel %vm411, %v406, 32
        %v420 = vsel %vm412, %v407, 32
        %v421 = vsel %vm413, %v407, 32
        %v422 = vsel %vm414, %v408, 32
        %v423 = vsel %vm415, %v408, 32
        %v424 = vsel %vm416, %v409, 32
        %v425 = vsel %vm417, %v409, 32
        %vm426 = vcmp.lt.s32.totalorder %v418, %v422
        %v427 = vsel %vm426, %v418, %v422
        %vm428 = vcmp.lt.s32.totalorder %v420, %v424
        %v429 = vsel %vm428, %v420, %v424
        %vm430 = vcmp.lt.s32.totalorder %v427, %v429
        %v431 = vsel %vm430, %v427, %v429
        %v432 = vrot.slane %v431, 4
        %vm433 = vcmp.lt.s32.totalorder %v431, %v432
        %v434 = vsel %vm433, %v431, %v432
        %v435 = vrot.slane %v434, 2
        %vm436 = vcmp.lt.s32.totalorder %v434, %v435
        %v437 = vsel %vm436, %v434, %v435
        %v438 = vrot.slane %v437, 1
        %vm439 = vcmp.lt.s32.totalorder %v437, %v438
        %v440 = vsel %vm439, %v437, %v438
        %vm441 = vcmp.lt.s32.totalorder %v419, %v423
        %v442 = vsel %vm441, %v419, %v423
        %vm443 = vcmp.lt.s32.totalorder %v421, %v425
        %v444 = vsel %vm443, %v421, %v425
        %vm445 = vcmp.lt.s32.totalorder %v442, %v444
        %v446 = vsel %vm445, %v442, %v444
        %v447 = vrot.slane %v446, 4
        %vm448 = vcmp.lt.s32.totalorder %v446, %v447
        %v449 = vsel %vm448, %v446, %v447
        %v450 = vrot.slane %v449, 2
        %vm451 = vcmp.lt.s32.totalorder %v449, %v450
        %v452 = vsel %vm451, %v449, %v450
        %v453 = vrot.slane %v452, 1
        %vm454 = vcmp.lt.s32.totalorder %v452, %v453
        %v455 = vsel %vm454, %v452, %v453
        %vm456 = vcmp.eq.s32.totalorder %v406, %v440
        %vm457 = vcmp.eq.s32.totalorder %v406, %v455
        %vm458 = vcmp.eq.s32.totalorder %v407, %v440
        %vm459 = vcmp.eq.s32.totalorder %v407, %v455
        %vm460 = vcmp.eq.s32.totalorder %v408, %v440
        %vm461 = vcmp.eq.s32.totalorder %v408, %v455
        %vm462 = vcmp.eq.s32.totalorder %v409, %v440
        %vm463 = vcmp.eq.s32.totalorder %v409, %v455
        %v464 = vsel %vm456, 1, 0
        %v465 = vsel %vm457, 1, 0
        %v466 = vsel %vm458, 1, 0
        %v467 = vsel %vm459, 1, 0
        %v468 = vsel %vm460, 1, 0
        %v469 = vsel %vm461, 1, 0
        %v470 = vsel %vm462, 1, 0
        %v471 = vsel %vm463, 1, 0
        %v472 = vcvt.s32.f32 %v464
        %v473 = vcvt.s32.f32 %v465
        %v474 = vcvt.s32.f32 %v466
        %v475 = vcvt.s32.f32 %v467
        %v476 = vcvt.s32.f32 %v468
        %v477 = vcvt.s32.f32 %v469
        %v478 = vcvt.s32.f32 %v470
        %v479 = vcvt.s32.f32 %v471
        %480 = vxpose.xlu0.b32.start [1/16] %v280, 128
        %481 = vxpose.xlu0.b32.cont [2/16] %v281, 128
        %482 = vxpose.xlu0.b32.cont [3/16] %v282, 128
        %483 = vxpose.xlu0.b32.cont [4/16] %v283, 128
        %484 = vxpose.xlu0.b32.cont [5/16] 0.0, 128
        %485 = vxpose.xlu0.b32.cont [6/16] 0.0, 128
        %486 = vxpose.xlu0.b32.cont [7/16] 0.0, 128
        %487 = vxpose.xlu0.b32.cont [8/16] 0.0, 128
        %488 = vxpose.xlu0.b32.cont [9/16] 0.0, 128
        %489 = vxpose.xlu0.b32.cont [10/16] 0.0, 128
        %490 = vxpose.xlu0.b32.cont [11/16] 0.0, 128
        %491 = vxpose.xlu0.b32.cont [12/16] 0.0, 128
        %492 = vxpose.xlu0.b32.cont [13/16] 0.0, 128
        %493 = vxpose.xlu0.b32.cont [14/16] 0.0, 128
        %494 = vxpose.xlu0.b32.cont [15/16] 0.0, 128
        %495 = vxpose.xlu0.b32.end [16/16] 0.0, 128
        %v496 = vpop.trf.xlu0
        %v497 = vpop.trf.xlu0
        %v498 = vpop.trf.xlu0
        %v499 = vpop.trf.xlu0
        %v500 = vpop.trf.xlu0
        %v501 = vpop.trf.xlu0
        %v502 = vpop.trf.xlu0
        %v503 = vpop.trf.xlu0
        %v504 = vpop.trf.xlu0
        %v505 = vpop.trf.xlu0
        %v506 = vpop.trf.xlu0
        %v507 = vpop.trf.xlu0
        %v508 = vpop.trf.xlu0
        %v509 = vpop.trf.xlu0
        %v510 = vpop.trf.xlu0
        %v511 = vpop.trf.xlu0
        %vm512 = vcmask 261120
        %v514 = vsel %vm512, %v496, 0
        %516 = vmatpush.msra.mxu0 0.0
        %517 = vmatpush.msra.mxu0 0.0
        %518 = vmatpush.msra.mxu0 0.0
        %519 = vmatpush.msra.mxu0 0.0
        %520 = vmatpush.msra.mxu0 0.0
        %521 = vmatpush.msra.mxu0 0.0
        %522 = vmatpush.msra.mxu0 0.0
        %523 = vmatpush.msra.mxu0 0.0
        %524 = vmatpush.msra.mxu0 0.0
        %525 = vmatpush.msra.mxu0 0.0
        %526 = vmatpush.msra.mxu0 0.0
        %527 = vmatpush.msra.mxu0 0.0
        %528 = vmatpush.msra.mxu0 %v478
        %529 = vmatpush.msra.mxu0 %v476
        %530 = vmatpush.msra.mxu0 %v474
        %531 = vmatpush.msra.mxu0 %v472
        %532 = vmatmul.f32.gmra.mxu0 %v514
        %v533 = vpop.f32.mrf.mxu0
        %v534 = vadd.f32 0.0, %v533
        %535 = vdwg.mxu0
        %536 = vmatpush.msra.mxu0 0.0
        %537 = vmatpush.msra.mxu0 0.0
        %538 = vmatpush.msra.mxu0 0.0
        %539 = vmatpush.msra.mxu0 0.0
        %540 = vmatpush.msra.mxu0 0.0
        %541 = vmatpush.msra.mxu0 0.0
        %542 = vmatpush.msra.mxu0 0.0
        %543 = vmatpush.msra.mxu0 0.0
        %544 = vmatpush.msra.mxu0 0.0
        %545 = vmatpush.msra.mxu0 0.0
        %546 = vmatpush.msra.mxu0 0.0
        %547 = vmatpush.msra.mxu0 0.0
        %548 = vmatpush.msra.mxu0 %v479
        %549 = vmatpush.msra.mxu0 %v477
        %550 = vmatpush.msra.mxu0 %v475
        %551 = vmatpush.msra.mxu0 %v473
        %552 = vmatmul.f32.gmra.mxu0 %v514
        %v553 = vpop.f32.mrf.mxu0
        %v554 = vadd.f32 0.0, %v553
        %555 = vdwg.mxu0
        %556 = vst [vmem:[%s250] sm:$0xff] %v534
        %557 = vst [vmem:[%s250 + $0x8] sm:$0xff] %v554
        %v558 = vrot.slane %v455, 7
        %vm559 = vcmask 1040384
        %v560 = vsel %vm559, %v440, %v558
        %v561 = vlaneseq
        %vm562 = vcmp.ge.s32.totalorder %v561, 0
        %vm563 = vcmp.lt.s32.totalorder %v561, 256
        %vm564 = vmand %vm562, %vm563
        %565 = vst.msk [vmem:[%s257] sm:$0x3] %vm564, %v560
        %v566 = vsub.f32 %v534, %v278
        %v567 = vsub.f32 %v554, %v279
        %v568 = vmul.f32 %v566, %v566
        %v569 = vmul.f32 %v567, %v567
        %v570 = vrot.slane %v568, 4
        %v571 = vadd.f32 %v568, %v570
        %v572 = vrot.slane %v571, 2
        %v573 = vadd.f32 %v571, %v572
        %v574 = vrot.slane %v573, 1
        %v575 = vadd.f32 %v573, %v574
        %v576 = vrot.slane %v569, 4
        %v577 = vadd.f32 %v569, %v576
        %v578 = vrot.slane %v577, 2
        %v579 = vadd.f32 %v577, %v578
        %v580 = vrot.slane %v579, 1
        %v581 = vadd.f32 %v579, %v580
        %v584 = vrot.slane %v581, 7
        %v585 = vsel %vm559, %v575, %v584
        %587 = vst.msk [vmem:[%s264] sm:$0x3] %vm564, %v585
        %s588 = sand.u32 %s115, 1
        %s589 = scalar_lea.sflag [#allocation3], %s588
        %s590 = sand.u32 %s115, 1
        %s591 = smul.addr %s590, 16
        %s592 = scalar_lea.vmem [#allocation2], %s591
        %s593 = sand.u32 %s23, 1
        %s594 = scalar_lea.sflag [#allocation5], %s593
        %s595 = sand.u32 %s143, 1
        %s596 = smul.addr %s595, 2
        %s597 = scalar_lea.vmem [#allocation4], %s596
        %s598 = sand.u32 %s23, 1
        %s599 = scalar_lea.sflag [#allocation5], %s598
        %s600 = sand.u32 %s171, 1
        %s601 = smul.addr %s600, 2
        %s602 = scalar_lea.vmem [#allocation6], %s601
        // Predicated region
        $region33: #{tpu_custom_call.1} parent=31 // pred_check
          %p603 = pneg %p125
        $region34: #{tpu_custom_call.1} parent=31 // pred_check_branch
          %605 = sbr.rel (%p603) target = $region36
        $region35: #{tpu_custom_call.1} parent=31 // pred_region
          %s606 = smul.u32 2, %s28
          %608 = vsyncadd %s589, 0
          %s609 = smul.addr %s27, 2
          %s610 = sadd.s32 %s606, %s609
          %s611 = smul.addr %s610, 8
          %s612 = scalar_lea.hbm %s3, %s611
          %s614 = sshll.u32 %s592, 4
          %s615 = int_to_ptr.vmem [resolvable:$true] %s614
          %s616 = sshll.u32 %s612, 4
          %s617 = int_to_ptr.hbm [resolvable:$true] %s616
          %619 = dma.vmem_to_hbm [thread:$0]  %s615, 256, %s617, %s589
        $region36: #{tpu_custom_call.1} parent=31 // pred_fallthru
          _
        // Predicated region
        $region37: #{tpu_custom_call.1} parent=31 // pred_check
          %p620 = pneg %p153
        $region38: #{tpu_custom_call.1} parent=31 // pred_check_branch
          %622 = sbr.rel (%p620) target = $region40
        $region39: #{tpu_custom_call.1} parent=31 // pred_region
          %s623 = smul.u32 2, %s28
          %625 = vsyncadd %s594, 0
          %s626 = smul.addr %s27, 2
          %s627 = sadd.s32 %s623, %s626
          %s628 = scalar_lea.hbm %s4, %s627
          %s630 = sshll.u32 %s597, 4
          %s631 = int_to_ptr.vmem [resolvable:$true] %s630
          %s632 = sshll.u32 %s628, 4
          %s633 = int_to_ptr.hbm [resolvable:$true] %s632
          %635 = dma.vmem_to_hbm [thread:$0]  %s631, 32, %s633, %s594
        $region40: #{tpu_custom_call.1} parent=31 // pred_fallthru
          _
        // Predicated region
        $region41: #{tpu_custom_call.1} parent=31 // pred_check
          %p636 = pneg %p181
        $region42: #{tpu_custom_call.1} parent=31 // pred_check_branch
          %638 = sbr.rel (%p636) target = $region44
        $region43: #{tpu_custom_call.1} parent=31 // pred_region
          %s639 = smul.u32 2, %s28
          %641 = vsyncadd %s599, 0
          %s642 = smul.addr %s27, 2
          %s643 = sadd.s32 %s639, %s642
          %s644 = scalar_lea.hbm %s5, %s643
          %s646 = sshll.u32 %s602, 4
          %s647 = int_to_ptr.vmem [resolvable:$true] %s646
          %s648 = sshll.u32 %s644, 4
          %s649 = int_to_ptr.hbm [resolvable:$true] %s648
          %651 = dma.vmem_to_hbm [thread:$0]  %s647, 32, %s649, %s599
        $region44: #{tpu_custom_call.1} parent=31 // pred_fallthru
          _
      $region32: #{tpu_custom_call.1} parent=5 // pred_fallthru
        _
      %p652 = scmp.le.s32.totalorder 2, %s18
      // Predicated region
      $region45: #{tpu_custom_call.1} parent=5 // pred_check
        %p653 = pneg %p652
      $region46: #{tpu_custom_call.1} parent=5 // pred_check_branch
        %655 = sbr.rel (%p653) target = $region48
      $region47: #{tpu_custom_call.1} parent=5 // pred_region
        %s656 = ssub.s32 %s18, 2
        // Predicated region
        $region49: #{tpu_custom_call.1} parent=47 // pred_check
          %p657 = pneg %p131
        $region50: #{tpu_custom_call.1} parent=47 // pred_check_branch
          %659 = sbr.rel (%p657) target = $region52
        $region51: #{tpu_custom_call.1} parent=47 // pred_region
          %s660 = sand.u32 %s116, 1
          %s661 = scalar_lea.sflag [#allocation3], %s660
          %s662 = sand.u32 %s116, 1
          %s663 = smul.addr %s662, 16
          %s664 = scalar_lea.vmem [#allocation2], %s663
          %666 = dma.done %s661, 256
        $region52: #{tpu_custom_call.1} parent=47 // pred_fallthru
          _
        // Predicated region
        $region53: #{tpu_custom_call.1} parent=47 // pred_check
          %p667 = pneg %p159
        $region54: #{tpu_custom_call.1} parent=47 // pred_check_branch
          %669 = sbr.rel (%p667) target = $region56
        $region55: #{tpu_custom_call.1} parent=47 // pred_region
          %s670 = sand.u32 %s24, 1
          %s671 = scalar_lea.sflag [#allocation5], %s670
          %s672 = sand.u32 %s144, 1
          %s673 = smul.addr %s672, 2
          %s674 = scalar_lea.vmem [#allocation4], %s673
          %676 = dma.done %s671, 32
        $region56: #{tpu_custom_call.1} parent=47 // pred_fallthru
          _
        // Predicated region
        $region57: #{tpu_custom_call.1} parent=47 // pred_check
          %p677 = pneg %p187
        $region58: #{tpu_custom_call.1} parent=47 // pred_check_branch
          %679 = sbr.rel (%p677) target = $region60
        $region59: #{tpu_custom_call.1} parent=47 // pred_region
          %s680 = sand.u32 %s24, 1
          %s681 = scalar_lea.sflag [#allocation5], %s680
          %s682 = sand.u32 %s172, 1
          %s683 = smul.addr %s682, 2
          %s684 = scalar_lea.vmem [#allocation6], %s683
          %686 = dma.done %s681, 32
        $region60: #{tpu_custom_call.1} parent=47 // pred_fallthru
          _
      $region48: #{tpu_custom_call.1} parent=5 // pred_fallthru
        _
    $region6: #{tpu_custom_call.1} parent=1 // loop_footer
      %s22 = sadd.s32 1, %s18
    $region7: #{tpu_custom_call.1} parent=1 // loop_footer_branch
      %17 = sbr.rel target = $region3
    $region8: #{tpu_custom_call.1} parent=1 // loop_exit
      _
    %687 = vsyncpa [#allocation3], 1
    %s688 = scalar_lea.sflag [#allocation3], 1
    %689 = vsyncpa %s688, 1
    %690 = vsyncpa [#allocation5], 1
    %s691 = scalar_lea.sflag [#allocation5], 1
    %692 = vsyncpa %s691, 1

</llo_original>
